<compile_context>
chip_gen: v7x
topology: tpu7x:2x2x1
jax: 0.10.0
libtpu: 0.0.40
codegen_flags: <defaults>
</compile_context>

<pallas_src>
import functools

import jax
import jax.numpy as jnp
import numpy as np
from jax.experimental import pallas as pl
from jax.experimental.pallas import tpu as pltpu


def _round_up(x, m):
    return ((x + m - 1) // m) * m


def _mlp_kernel(n_layers, x_ref, *refs):
    """refs = (w0, b0, w1, b1, ..., w_{L-1}, b_{L-1}, out_ref)."""
    out_ref = refs[-1]
    param_refs = refs[:-1]
    h = x_ref[...]                                    # bf16 activations in
    for i in range(n_layers):
        w = param_refs[2 * i][...]                    # bf16 resident weights
        b = param_refs[2 * i + 1][...]                # f32 bias row
        # MXU: bf16 operands, f32 accumulate.
        h = jnp.dot(h.astype(w.dtype), w,
                    preferred_element_type=jnp.float32) + b
        if i < n_layers - 1:
            # args.q_activation == "ReLU"; elementwise kept in f32 (VPU).
            h = jnp.maximum(h, 0.0)
    out_ref[...] = h.astype(out_ref.dtype)


def _pad_params(params, weight_dtype):
    """Zero-pad feature dims and cast weights (biases stay f32).

    Layer 0's input dim (obs_dim) is kept at its true size (the MXU pads K
    internally; padding it only inflates memory traffic).  Hidden / output
    dims are padded to multiples of 128 (full MXU N, lane-dense stores).
    """
    padded = []
    for li, (w, b) in enumerate(params):
        in_p = w.shape[0] if li == 0 else _round_up(w.shape[0], 128)
        out_p = _round_up(w.shape[1], 128)
        w_p = jnp.zeros((in_p, out_p), weight_dtype)
        w_p = w_p.at[: w.shape[0], : w.shape[1]].set(w.astype(weight_dtype))
        b_p = jnp.zeros((1, out_p), jnp.float32)
        b_p = b_p.at[0, : b.shape[0]].set(b.astype(jnp.float32))
        padded.append((w_p, b_p))
    return padded


def _choose_block_b(B, obs_p, act_p, max_feat, weight_bytes,
                    vmem_budget=48 * 1024 * 1024, target=512):
    """VMEM-budgeted batch tile (activations live in VMEM, not vregs)."""
    resident = 2 * weight_bytes                       # worst case: 2 buffers
    # Per batch-row VMEM: double-buffered bf16 x tile + double-buffered f32
    # out tile + live f32 activations (x2 headroom for matmul intermediates).
    per_row = 2 * obs_p * 2 + 2 * act_p * 4 + 2 * max_feat * 4
    cap = max(8, (vmem_budget - resident) // per_row)
    block_b = min(target, cap, _round_up(B, 8))
    # Ensure >= 2 grid steps whenever the batch can be split, so the
    # "parallel" batch axis can use both v7x TensorCores.
    if B > 8:
        block_b = min(block_b, _round_up(-(-B // 2), 8))
    # MXU-friendly rounding (128-row tiles; multiples of 8 below that).
    # TODO(synk): round to 256 on v6e/v7x when compute-bound at large hidden.
    if block_b >= 128:
        block_b = (block_b // 128) * 128
    else:
        block_b = max(8, (block_b // 8) * 8)
    return block_b


def qnetwork_forward(x, params, *, block_b=None, weight_dtype=jnp.bfloat16):
    """Pallas forward pass of QNetwork.critic.

    x:      [B, obs_dim] float array
    params: list of (W [in, out], b [out]) per Linear layer (unpadded, f32).
    returns q-values [B, n_actions] float32
    """
    B, obs_dim = x.shape
    n_layers = len(params)
    n_actions = params[-1][0].shape[1]

    # --- pad / cast params ----------------------------------------------------
    padded_params = _pad_params(params, weight_dtype)
    obs_p = padded_params[0][0].shape[0]              # == obs_dim (unpadded)
    act_p = padded_params[-1][0].shape[1]             # n_actions -> 128-mult
    max_feat = max(max(w.shape) for w, _ in padded_params)
    weight_bytes = sum(w.size * w.dtype.itemsize + b.size * b.dtype.itemsize
                       for w, b in padded_params)

    # --- batch tile (VMEM-budgeted) -------------------------------------------
    if block_b is None:
        block_b = _choose_block_b(B, obs_p, act_p, max_feat, weight_bytes)
    block_b = max(8, _round_up(block_b, 8))

    # --- bf16 input stream; pad batch dim only, fold cast into the copy -------
    b_pad = _round_up(B, block_b)
    x_bf16 = x.astype(jnp.bfloat16)
    if b_pad != B:
        x_bf16 = jnp.pad(x_bf16, ((0, b_pad - B), (0, 0)))

    flat_params = []
    for w_p, bias_p in padded_params:
        flat_params.append(w_p)
        flat_params.append(bias_p)

    grid = (b_pad // block_b,)

    # Explicit scoped-VMEM limit: resident weights (x2 worst case) + tiles.
    per_row = 2 * obs_p * 2 + 2 * act_p * 4 + 2 * max_feat * 4
    needed = 2 * weight_bytes + block_b * per_row
    vmem_limit = int(min(max(2 * needed, 32 * 1024 * 1024), 60 * 1024 * 1024))

    flops = 2 * b_pad * sum(w.shape[0] * w.shape[1] for w, _ in padded_params)
    bytes_accessed = x_bf16.size * 2 + weight_bytes + b_pad * act_p * 4

    kernel = functools.partial(_mlp_kernel, n_layers)
    out_shape = jax.ShapeDtypeStruct((b_pad, act_p), jnp.float32)
    x_spec = pl.BlockSpec((block_b, obs_p), lambda i: (i, 0))
    # Lane-dense 128-wide output block -> unmasked vst writeback.
    # TODO(synk): for very narrow action spaces at large B, benchmark an
    # unpadded (block_b, n_actions) out block (fewer HBM bytes, masked vst).
    out_spec = pl.BlockSpec((block_b, act_p), lambda i: (i, 0))

    def _call(single_buffer_weights):
        in_specs = [x_spec]
        for w_p, bias_p in padded_params:
            if single_buffer_weights:
                # Constant index_map => fetched once; one buffer halves the
                # resident-weight VMEM footprint.
                in_specs.append(pl.BlockSpec(w_p.shape, lambda i: (0, 0),
                                             pipeline_mode=pl.Buffered(1)))
                in_specs.append(pl.BlockSpec(bias_p.shape, lambda i: (0, 0),
                                             pipeline_mode=pl.Buffered(1)))
            else:
                in_specs.append(pl.BlockSpec(w_p.shape, lambda i: (0, 0)))
                in_specs.append(pl.BlockSpec(bias_p.shape, lambda i: (0, 0)))
        return pl.pallas_call(
            kernel,
            out_shape=out_shape,
            grid=grid,
            in_specs=in_specs,
            out_specs=out_spec,
            compiler_params=pltpu.CompilerParams(
                dimension_semantics=("parallel",),
                vmem_limit_bytes=vmem_limit,
            ),
            cost_estimate=pl.CostEstimate(
                flops=flops, transcendentals=0,
                bytes_accessed=bytes_accessed),
        )(x_bf16, *flat_params)

    try:
        out_padded = _call(single_buffer_weights=True)
    except Exception:
        # Fallback if this Pallas build rejects pipeline_mode on pallas_call
        # BlockSpecs; vmem_limit already budgets for double-buffered weights.
        out_padded = _call(single_buffer_weights=False)

    return out_padded[:B, :n_actions]


def init_qnetwork_params(key, obs_dim, hidden, n_actions, num_hidden_layers,
                         q_last_layer_std=1.0):
    """Orthogonal init ('orthogonal_gain' path of layer_init), biases = 0,
    matching the torch module's shapes (stored as [in, out])."""
    sizes = [obs_dim] + [hidden] * (num_hidden_layers + 1) + [n_actions]
    gains = [np.sqrt(2)] * (num_hidden_layers + 1) + [q_last_layer_std]
    params = []
    keys = jax.random.split(key, len(sizes) - 1)
    for k, fan_in, fan_out, gain in zip(keys, sizes[:-1], sizes[1:], gains):
        # torch orthogonal_ acts on the [out, in] matrix; transpose to [in, out].
        w_oi = jax.nn.initializers.orthogonal(scale=gain)(
            k, (fan_out, fan_in), jnp.float32)
        params.append((w_oi.T, jnp.zeros((fan_out,), jnp.float32)))
    return params


def qnetwork_forward_ref(x, params, weight_dtype=jnp.bfloat16):
    """Pure-JAX reference replicating the kernel's bf16-operand / f32-accumulate
    arithmetic (zero feature/batch padding does not change valid outputs)."""
    h = x.astype(weight_dtype)
    for i, (w, b) in enumerate(params):
        h = jnp.dot(h.astype(weight_dtype), w.astype(weight_dtype),
                    preferred_element_type=jnp.float32) + b.astype(jnp.float32)
        if i < len(params) - 1:
            h = jnp.maximum(h, 0.0)
    return h


def qnetwork_forward_ref_f32(x, params):
    h = x
    for i, (w, b) in enumerate(params):
        h = h @ w + b
        if i < len(params) - 1:
            h = jnp.maximum(h, 0.0)
    return h


if __name__ == "__main__":
    # Small synthetic config: obs_dim=4, q_hidden_size=32,
    # q_num_hidden_layers=1, n_actions=2, q_activation=ReLU.
    B, OBS, HID, ACT, NHID = 16, 4, 32, 2, 1

    key = jax.random.PRNGKey(0)
    k_params, k_x = jax.random.split(key)
    params = init_qnetwork_params(k_params, OBS, HID, ACT, NHID,
                                  q_last_layer_std=1.0)
    x = jax.random.normal(k_x, (B, OBS), jnp.float32)

    q = qnetwork_forward(x, params)
    q = jax.block_until_ready(q)
    assert q.shape == (B, ACT)

    # Exact-arithmetic check (same bf16-operand / f32-accumulate math).
    q_ref = qnetwork_forward_ref(x, params)
    np.testing.assert_allclose(np.asarray(q), np.asarray(q_ref),
                               rtol=1e-4, atol=1e-4)

    # Semantic sanity check vs full-f32 reference (bf16 quantization only).
    q_ref_f32 = qnetwork_forward_ref_f32(x, params)
    np.testing.assert_allclose(np.asarray(q), np.asarray(q_ref_f32),
                               rtol=5e-2, atol=5e-2)

    # Ragged batch (B % 8 != 0): padded internally, sliced back.
    x_r = x[:13]
    q_r = jax.block_until_ready(qnetwork_forward(x_r, params))
    np.testing.assert_allclose(np.asarray(q_r),
                               np.asarray(qnetwork_forward_ref(x_r, params)),
                               rtol=1e-4, atol=1e-4)

    print("KERNEL_OK")
</pallas_src>

<mosaic_0001>
module attributes {stable_mosaic.version = 11 : i64} {
  func.func @_mlp_kernel(%arg0: i32, %arg1: memref<8x4xbf16, #tpu.memory_space<vmem>>, %arg2: memref<4x128xbf16, #tpu.memory_space<vmem>>, %arg3: memref<1x128xf32, #tpu.memory_space<vmem>>, %arg4: memref<128x128xbf16, #tpu.memory_space<vmem>>, %arg5: memref<1x128xf32, #tpu.memory_space<vmem>>, %arg6: memref<128x128xbf16, #tpu.memory_space<vmem>>, %arg7: memref<1x128xf32, #tpu.memory_space<vmem>>, %arg8: memref<8x128xf32, #tpu.memory_space<vmem>>) attributes {dimension_semantics = [#tpu.dimension_semantics<parallel>], iteration_bounds = array<i64: 2>, scalar_prefetch = 0 : i64, scratch_operands = 0 : i64, tpu.core_type = #tpu.core_type<tc>, window_params = [{transform_indices = @transform_0, window_bounds = array<i64: 8, 4>}, {pipeline_mode = #tpu.pipeline_mode<synchronous>, transform_indices = @transform_1, window_bounds = array<i64: 4, 128>}, {pipeline_mode = #tpu.pipeline_mode<synchronous>, transform_indices = @transform_2, window_bounds = array<i64: 1, 128>}, {pipeline_mode = #tpu.pipeline_mode<synchronous>, transform_indices = @transform_3, window_bounds = array<i64: 128, 128>}, {pipeline_mode = #tpu.pipeline_mode<synchronous>, transform_indices = @transform_4, window_bounds = array<i64: 1, 128>}, {pipeline_mode = #tpu.pipeline_mode<synchronous>, transform_indices = @transform_5, window_bounds = array<i64: 128, 128>}, {pipeline_mode = #tpu.pipeline_mode<synchronous>, transform_indices = @transform_6, window_bounds = array<i64: 1, 128>}, {transform_indices = @transform_7, window_bounds = array<i64: 8, 128>}]} {
    %c0 = arith.constant 0 : index
    %c0_0 = arith.constant 0 : index
    %0 = vector.load %arg1[%c0, %c0_0] : memref<8x4xbf16, #tpu.memory_space<vmem>>, vector<8x4xbf16>
    %c0_1 = arith.constant 0 : index
    %c0_2 = arith.constant 0 : index
    %1 = vector.load %arg2[%c0_1, %c0_2] : memref<4x128xbf16, #tpu.memory_space<vmem>>, vector<4x128xbf16>
    %c0_3 = arith.constant 0 : index
    %c0_4 = arith.constant 0 : index
    %2 = vector.load %arg3[%c0_3, %c0_4] : memref<1x128xf32, #tpu.memory_space<vmem>>, vector<1x128xf32>
    %cst = arith.constant dense<0.000000e+00> : vector<8x128xf32>
    %3 = tpu.matmul %0, %1, %cst {dimension_numbers = #tpu.dot_dimension_numbers<[1], [0], [0], [1], [0, 0, 1, 1], [], []>} : vector<8x4xbf16>, vector<4x128xbf16>, vector<8x128xf32> -> vector<8x128xf32>
    %4 = vector.broadcast %2 : vector<1x128xf32> to vector<8x128xf32>
    %5 = arith.addf %3, %4 : vector<8x128xf32>
    %cst_5 = arith.constant 0.000000e+00 : f32
    %6 = vector.broadcast %cst_5 : f32 to vector<8x128xf32>
    %7 = arith.maximumf %5, %6 : vector<8x128xf32>
    %c0_6 = arith.constant 0 : index
    %c0_7 = arith.constant 0 : index
    %8 = vector.load %arg4[%c0_6, %c0_7] : memref<128x128xbf16, #tpu.memory_space<vmem>>, vector<128x128xbf16>
    %c0_8 = arith.constant 0 : index
    %c0_9 = arith.constant 0 : index
    %9 = vector.load %arg5[%c0_8, %c0_9] : memref<1x128xf32, #tpu.memory_space<vmem>>, vector<1x128xf32>
    %10 = arith.truncf %7 : vector<8x128xf32> to vector<8x128xbf16>
    %cst_10 = arith.constant dense<0.000000e+00> : vector<8x128xf32>
    %11 = tpu.matmul %10, %8, %cst_10 {dimension_numbers = #tpu.dot_dimension_numbers<[1], [0], [0], [1], [0, 0, 1, 1], [], []>} : vector<8x128xbf16>, vector<128x128xbf16>, vector<8x128xf32> -> vector<8x128xf32>
    %12 = vector.broadcast %9 : vector<1x128xf32> to vector<8x128xf32>
    %13 = arith.addf %11, %12 : vector<8x128xf32>
    %cst_11 = arith.constant 0.000000e+00 : f32
    %14 = vector.broadcast %cst_11 : f32 to vector<8x128xf32>
    %15 = arith.maximumf %13, %14 : vector<8x128xf32>
    %c0_12 = arith.constant 0 : index
    %c0_13 = arith.constant 0 : index
    %16 = vector.load %arg6[%c0_12, %c0_13] : memref<128x128xbf16, #tpu.memory_space<vmem>>, vector<128x128xbf16>
    %c0_14 = arith.constant 0 : index
    %c0_15 = arith.constant 0 : index
    %17 = vector.load %arg7[%c0_14, %c0_15] : memref<1x128xf32, #tpu.memory_space<vmem>>, vector<1x128xf32>
    %18 = arith.truncf %15 : vector<8x128xf32> to vector<8x128xbf16>
    %cst_16 = arith.constant dense<0.000000e+00> : vector<8x128xf32>
    %19 = tpu.matmul %18, %16, %cst_16 {dimension_numbers = #tpu.dot_dimension_numbers<[1], [0], [0], [1], [0, 0, 1, 1], [], []>} : vector<8x128xbf16>, vector<128x128xbf16>, vector<8x128xf32> -> vector<8x128xf32>
    %20 = vector.broadcast %17 : vector<1x128xf32> to vector<8x128xf32>
    %21 = arith.addf %19, %20 : vector<8x128xf32>
    %c0_17 = arith.constant 0 : index
    %c0_18 = arith.constant 0 : index
    %22 = vector.load %arg8[%c0_17, %c0_18] : memref<8x128xf32, #tpu.memory_space<vmem>>, vector<8x128xf32>
    tpu.vector_store %arg8[%c0_17, %c0_18], %21 {strides = array<i32>} : memref<8x128xf32, #tpu.memory_space<vmem>>, vector<8x128xf32>,
    return
  }
  func.func @transform_0(%arg0: i32) -> (i32, i32) {
    %c0_i32 = arith.constant 0 : i32
    %c0_i32_0 = arith.constant 0 : i32
    return %arg0, %c0_i32 : i32, i32
  }
  func.func @transform_1(%arg0: i32) -> (i32, i32) {
    %c0_i32 = arith.constant 0 : i32
    %c0_i32_0 = arith.constant 0 : i32
    %c0_i32_1 = arith.constant 0 : i32
    return %c0_i32, %c0_i32_0 : i32, i32
  }
  func.func @transform_2(%arg0: i32) -> (i32, i32) {
    %c0_i32 = arith.constant 0 : i32
    %c0_i32_0 = arith.constant 0 : i32
    %c0_i32_1 = arith.constant 0 : i32
    return %c0_i32, %c0_i32_0 : i32, i32
  }
  func.func @transform_3(%arg0: i32) -> (i32, i32) {
    %c0_i32 = arith.constant 0 : i32
    %c0_i32_0 = arith.constant 0 : i32
    %c0_i32_1 = arith.constant 0 : i32
    return %c0_i32, %c0_i32_0 : i32, i32
  }
  func.func @transform_4(%arg0: i32) -> (i32, i32) {
    %c0_i32 = arith.constant 0 : i32
    %c0_i32_0 = arith.constant 0 : i32
    %c0_i32_1 = arith.constant 0 : i32
    return %c0_i32, %c0_i32_0 : i32, i32
  }
  func.func @transform_5(%arg0: i32) -> (i32, i32) {
    %c0_i32 = arith.constant 0 : i32
    %c0_i32_0 = arith.constant 0 : i32
    %c0_i32_1 = arith.constant 0 : i32
    return %c0_i32, %c0_i32_0 : i32, i32
  }
  func.func @transform_6(%arg0: i32) -> (i32, i32) {
    %c0_i32 = arith.constant 0 : i32
    %c0_i32_0 = arith.constant 0 : i32
    %c0_i32_1 = arith.constant 0 : i32
    return %c0_i32, %c0_i32_0 : i32, i32
  }
  func.func @transform_7(%arg0: i32) -> (i32, i32) {
    %c0_i32 = arith.constant 0 : i32
    %c0_i32_0 = arith.constant 0 : i32
    return %arg0, %c0_i32 : i32, i32
  }
}

module attributes {stable_mosaic.version = 11 : i64} {
  func.func @_mlp_kernel(%arg0: i32, %arg1: memref<8x4xbf16, #tpu.memory_space<vmem>>, %arg2: memref<4x128xbf16, #tpu.memory_space<vmem>>, %arg3: memref<1x128xf32, #tpu.memory_space<vmem>>, %arg4: memref<128x128xbf16, #tpu.memory_space<vmem>>, %arg5: memref<1x128xf32, #tpu.memory_space<vmem>>, %arg6: memref<128x128xbf16, #tpu.memory_space<vmem>>, %arg7: memref<1x128xf32, #tpu.memory_space<vmem>>, %arg8: memref<8x128xf32, #tpu.memory_space<vmem>>) attributes {dimension_semantics = [#tpu.dimension_semantics<parallel>], iteration_bounds = array<i64: 2>, scalar_prefetch = 0 : i64, scratch_operands = 0 : i64, tpu.core_type = #tpu.core_type<tc>, window_params = [{transform_indices = @transform_0, window_bounds = array<i64: 8, 4>}, {pipeline_mode = #tpu.pipeline_mode<synchronous>, transform_indices = @transform_1, window_bounds = array<i64: 4, 128>}, {pipeline_mode = #tpu.pipeline_mode<synchronous>, transform_indices = @transform_2, window_bounds = array<i64: 1, 128>}, {pipeline_mode = #tpu.pipeline_mode<synchronous>, transform_indices = @transform_3, window_bounds = array<i64: 128, 128>}, {pipeline_mode = #tpu.pipeline_mode<synchronous>, transform_indices = @transform_4, window_bounds = array<i64: 1, 128>}, {pipeline_mode = #tpu.pipeline_mode<synchronous>, transform_indices = @transform_5, window_bounds = array<i64: 128, 128>}, {pipeline_mode = #tpu.pipeline_mode<synchronous>, transform_indices = @transform_6, window_bounds = array<i64: 1, 128>}, {transform_indices = @transform_7, window_bounds = array<i64: 8, 128>}]} {
    %c0 = arith.constant 0 : index
    %c0_0 = arith.constant 0 : index
    %0 = vector.load %arg1[%c0, %c0_0] : memref<8x4xbf16, #tpu.memory_space<vmem>>, vector<8x4xbf16>
    %c0_1 = arith.constant 0 : index
    %c0_2 = arith.constant 0 : index
    %1 = vector.load %arg2[%c0_1, %c0_2] : memref<4x128xbf16, #tpu.memory_space<vmem>>, vector<4x128xbf16>
    %c0_3 = arith.constant 0 : index
    %c0_4 = arith.constant 0 : index
    %2 = vector.load %arg3[%c0_3, %c0_4] : memref<1x128xf32, #tpu.memory_space<vmem>>, vector<1x128xf32>
    %cst = arith.constant dense<0.000000e+00> : vector<8x128xf32>
    %3 = tpu.matmul %0, %1, %cst {dimension_numbers = #tpu.dot_dimension_numbers<[1], [0], [0], [1], [0, 0, 1, 1], [], []>} : vector<8x4xbf16>, vector<4x128xbf16>, vector<8x128xf32> -> vector<8x128xf32>
    %4 = vector.broadcast %2 : vector<1x128xf32> to vector<8x128xf32>
    %5 = arith.addf %3, %4 : vector<8x128xf32>
    %cst_5 = arith.constant 0.000000e+00 : f32
    %6 = vector.broadcast %cst_5 : f32 to vector<8x128xf32>
    %7 = arith.maximumf %5, %6 : vector<8x128xf32>
    %c0_6 = arith.constant 0 : index
    %c0_7 = arith.constant 0 : index
    %8 = vector.load %arg4[%c0_6, %c0_7] : memref<128x128xbf16, #tpu.memory_space<vmem>>, vector<128x128xbf16>
    %c0_8 = arith.constant 0 : index
    %c0_9 = arith.constant 0 : index
    %9 = vector.load %arg5[%c0_8, %c0_9] : memref<1x128xf32, #tpu.memory_space<vmem>>, vector<1x128xf32>
    %10 = arith.truncf %7 : vector<8x128xf32> to vector<8x128xbf16>
    %cst_10 = arith.constant dense<0.000000e+00> : vector<8x128xf32>
    %11 = tpu.matmul %10, %8, %cst_10 {dimension_numbers = #tpu.dot_dimension_numbers<[1], [0], [0], [1], [0, 0, 1, 1], [], []>} : vector<8x128xbf16>, vector<128x128xbf16>, vector<8x128xf32> -> vector<8x128xf32>
    %12 = vector.broadcast %9 : vector<1x128xf32> to vector<8x128xf32>
    %13 = arith.addf %11, %12 : vector<8x128xf32>
    %cst_11 = arith.constant 0.000000e+00 : f32
    %14 = vector.broadcast %cst_11 : f32 to vector<8x128xf32>
    %15 = arith.maximumf %13, %14 : vector<8x128xf32>
    %c0_12 = arith.constant 0 : index
    %c0_13 = arith.constant 0 : index
    %16 = vector.load %arg6[%c0_12, %c0_13] : memref<128x128xbf16, #tpu.memory_space<vmem>>, vector<128x128xbf16>
    %c0_14 = arith.constant 0 : index
    %c0_15 = arith.constant 0 : index
    %17 = vector.load %arg7[%c0_14, %c0_15] : memref<1x128xf32, #tpu.memory_space<vmem>>, vector<1x128xf32>
    %18 = arith.truncf %15 : vector<8x128xf32> to vector<8x128xbf16>
    %cst_16 = arith.constant dense<0.000000e+00> : vector<8x128xf32>
    %19 = tpu.matmul %18, %16, %cst_16 {dimension_numbers = #tpu.dot_dimension_numbers<[1], [0], [0], [1], [0, 0, 1, 1], [], []>} : vector<8x128xbf16>, vector<128x128xbf16>, vector<8x128xf32> -> vector<8x128xf32>
    %20 = vector.broadcast %17 : vector<1x128xf32> to vector<8x128xf32>
    %21 = arith.addf %19, %20 : vector<8x128xf32>
    %c0_17 = arith.constant 0 : index
    %c0_18 = arith.constant 0 : index
    %22 = vector.load %arg8[%c0_17, %c0_18] : memref<8x128xf32, #tpu.memory_space<vmem>>, vector<8x128xf32>
    tpu.vector_store %arg8[%c0_17, %c0_18], %21 {strides = array<i32>} : memref<8x128xf32, #tpu.memory_space<vmem>>, vector<8x128xf32>,
    return
  }
  func.func @transform_0(%arg0: i32) -> (i32, i32) {
    %c0_i32 = arith.constant 0 : i32
    %c0_i32_0 = arith.constant 0 : i32
    return %arg0, %c0_i32 : i32, i32
  }
  func.func @transform_1(%arg0: i32) -> (i32, i32) {
    %c0_i32 = arith.constant 0 : i32
    %c0_i32_0 = arith.constant 0 : i32
    %c0_i32_1 = arith.constant 0 : i32
    return %c0_i32, %c0_i32_0 : i32, i32
  }
  func.func @transform_2(%arg0: i32) -> (i32, i32) {
    %c0_i32 = arith.constant 0 : i32
    %c0_i32_0 = arith.constant 0 : i32
    %c0_i32_1 = arith.constant 0 : i32
    return %c0_i32, %c0_i32_0 : i32, i32
  }
  func.func @transform_3(%arg0: i32) -> (i32, i32) {
    %c0_i32 = arith.constant 0 : i32
    %c0_i32_0 = arith.constant 0 : i32
    %c0_i32_1 = arith.constant 0 : i32
    return %c0_i32, %c0_i32_0 : i32, i32
  }
  func.func @transform_4(%arg0: i32) -> (i32, i32) {
    %c0_i32 = arith.constant 0 : i32
    %c0_i32_0 = arith.constant 0 : i32
    %c0_i32_1 = arith.constant 0 : i32
    return %c0_i32, %c0_i32_0 : i32, i32
  }
  func.func @transform_5(%arg0: i32) -> (i32, i32) {
    %c0_i32 = arith.constant 0 : i32
    %c0_i32_0 = arith.constant 0 : i32
    %c0_i32_1 = arith.constant 0 : i32
    return %c0_i32, %c0_i32_0 : i32, i32
  }
  func.func @transform_6(%arg0: i32) -> (i32, i32) {
    %c0_i32 = arith.constant 0 : i32
    %c0_i32_0 = arith.constant 0 : i32
    %c0_i32_1 = arith.constant 0 : i32
    return %c0_i32, %c0_i32_0 : i32, i32
  }
  func.func @transform_7(%arg0: i32) -> (i32, i32) {
    %c0_i32 = arith.constant 0 : i32
    %c0_i32_0 = arith.constant 0 : i32
    return %arg0, %c0_i32 : i32, i32
  }
}

</mosaic_0001>

<llo_original>
// kernel: tpu_custom_call.1
$region0: #{tpu_custom_call.1}
  #allocation0 [shape = 'u32[]', space=smem, size = 0x4, offset = 0x4, fixed_abs, tag = 'smem constant byte address 0x4 - core index']
  #allocation1 [shape = 'u32[144,128]{1,0:T(1,128)}', space=vmem, size = 0x12000, scoped, tag = 'internal scratch']
  %s0 = inlined_call_operand.vmem [shape: bf16[16,4], index: 0, kind: input, shape index: {}]
  %s1 = inlined_call_operand.vmem [shape: bf16[4,128], index: 1, kind: input, shape index: {}]
  %s2 = inlined_call_operand.vmem [shape: f32[1,128], index: 2, kind: input, shape index: {}]
  %s3 = inlined_call_operand.hbm [shape: bf16[128,128], index: 3, kind: input, shape index: {}]
  %s4 = inlined_call_operand.vmem [shape: f32[1,128], index: 4, kind: input, shape index: {}]
  %s5 = inlined_call_operand.hbm [shape: bf16[128,128], index: 5, kind: input, shape index: {}]
  %s6 = inlined_call_operand.vmem [shape: f32[1,128], index: 6, kind: input, shape index: {}]
  %s7 = inlined_call_operand.hbm [shape: f32[16,128], index: 7, kind: output, shape index: {}]
  %s8 = sld [smem:[#allocation0]]
  $region69: #{tpu_custom_call.1} parent=0
    _
  %s10 = ssub.s32 1, %s8
  %s11 = scalar_select 0, %s10, %s8
  $region1: #{tpu_custom_call.1} parent=0
    #allocation2 [shape = 'u8[32768]{0}', space=vmem, size = 0x8000, scoped, tag = 'input window, operand 3, single buffered']
    #allocation3 [shape = 's32[2]{0}', space=sflag, size = 0x8, scoped, tag = 'scoped memory for tpu_custom_call.1']
    #allocation4 [shape = 's32[2]{0}', space=sflag, size = 0x8, scoped, tag = 'scoped memory for tpu_custom_call.1']
    #allocation5 [shape = 'u8[32768]{0}', space=vmem, size = 0x8000, scoped, tag = 'input window, operand 5, single buffered']
    #allocation6 [shape = 's32[1]{0}', space=sflag, size = 0x4, scoped, tag = 'scoped memory for tpu_custom_call.1']
    #allocation7 [shape = 'u8[8192]{0}', space=vmem, size = 0x2000, scoped, tag = 'output window, operand 0']
    %12 = vsyncpa [#allocation3], 0
    %13 = vsyncpa [#allocation6], 0
    %14 = vsyncpa [#allocation4], 0
    %s15 = scalar_lea.sflag [#allocation4], 1
    %16 = vsyncpa %s15, 0
    loop: start=0, step=1, limit=4
    $region2: #{tpu_custom_call.1} parent=1 // loop_pre_header
      _
    $region3: #{tpu_custom_call.1} parent=1 // loop_header
      %s18 = sphi 0, %s22
      %p19 = scmp.ge.s32.totalorder %s18, 4
      %s28 = sphi 0, %s30
      %s31 = sphi 0, %s28
      %s32 = sphi 0, %s31
      %s48 = sphi 0, %s32
      %s52 = sphi 0, %s52
      %s54 = sphi 0, %s52
      %s55 = sphi 0, %s54
      %s69 = sphi 0, %s55
      %s73 = sphi 0, %s73
      %s75 = sphi 0, %s73
      %s76 = sphi 0, %s75
      %s90 = sphi 0, %s76
      %s94 = sphi 0, %s94
      %s96 = sphi 0, %s94
      %s97 = sphi 0, %s96
      %s111 = sphi 0, %s97
      %s115 = sphi 0, %s115
      %s117 = sphi 0, %s115
      %s118 = sphi 0, %s117
      %s132 = sphi 0, %s118
      %s136 = sphi 0, %s136
      %s138 = sphi 0, %s136
      %s139 = sphi 0, %s138
      %s153 = sphi 0, %s139
      %s157 = sphi 0, %s157
      %s159 = sphi 0, %s157
      %s160 = sphi 0, %s159
      %s174 = sphi 0, %s160
      %s180 = sphi 0, %s182
      %s183 = sphi 0, %s180
      %s184 = sphi 0, %s183
      %s200 = sphi 0, %s184
    $region4: #{tpu_custom_call.1} parent=1 // loop_header_branch
      %21 = sbr.rel (%p19) target = $region8
    $region5: #{tpu_custom_call.1} parent=1 // loop_body
      %s23 = ssub.s32 %s18, 1
      %s24 = ssub.s32 %s18, 2
      %s25 = sadd.s32 %s18, 1
      %s26 = ssub.s32 %s18, %s25
      %p27 = scmp.eq.s32.totalorder %s26, 0
      %s29 = sadd.s32 %s28, 1
      %s30 = scalar_select %p27, %s28, %s29
      %p33 = pneg %p27
      %p34 = scmp.eq.s32.totalorder %s18, 1
      %p35 = por %p33, %p34
      %p36 = scmp.ne.s32.totalorder %s28, %s31
      %p37 = scmp.eq.s32.totalorder %s18, 0
      %p38 = por %p36, %p37
      %p39 = scmp.ne.s32.totalorder %s28, %s31
      %p40 = scmp.eq.s32.totalorder %s23, 1
      %p41 = por %p39, %p40
      %p42 = scmp.ne.s32.totalorder %s31, %s32
      %p43 = scmp.eq.s32.totalorder %s23, 0
      %p44 = por %p42, %p43
      %p45 = scmp.ne.s32.totalorder %s31, %s32
      %p46 = scmp.eq.s32.totalorder %s24, 1
      %p47 = por %p45, %p46
      %p49 = scmp.ne.s32.totalorder %s32, %s48
      %p50 = scmp.eq.s32.totalorder %s24, 0
      %p51 = por %p49, %p50
      %s53 = sadd.s32 %s52, 1
      %p56 = scmp.eq.s32.totalorder %s18, 1
      %p57 = scmp.ne.s32.totalorder %s52, %s54
      %p58 = scmp.eq.s32.totalorder %s18, 0
      %p59 = por %p57, %p58
      %p60 = scmp.ne.s32.totalorder %s52, %s54
      %p61 = scmp.eq.s32.totalorder %s23, 1
      %p62 = por %p60, %p61
      %p63 = scmp.ne.s32.totalorder %s54, %s55
      %p64 = scmp.eq.s32.totalorder %s23, 0
      %p65 = por %p63, %p64
      %p66 = scmp.ne.s32.totalorder %s54, %s55
      %p67 = scmp.eq.s32.totalorder %s24, 1
      %p68 = por %p66, %p67
      %p70 = scmp.ne.s32.totalorder %s55, %s69
      %p71 = scmp.eq.s32.totalorder %s24, 0
      %p72 = por %p70, %p71
      %s74 = sadd.s32 %s73, 1
      %p77 = scmp.eq.s32.totalorder %s18, 1
      %p78 = scmp.ne.s32.totalorder %s73, %s75
      %p79 = scmp.eq.s32.totalorder %s18, 0
      %p80 = por %p78, %p79
      %p81 = scmp.ne.s32.totalorder %s73, %s75
      %p82 = scmp.eq.s32.totalorder %s23, 1
      %p83 = por %p81, %p82
      %p84 = scmp.ne.s32.totalorder %s75, %s76
      %p85 = scmp.eq.s32.totalorder %s23, 0
      %p86 = por %p84, %p85
      %p87 = scmp.ne.s32.totalorder %s75, %s76
      %p88 = scmp.eq.s32.totalorder %s24, 1
      %p89 = por %p87, %p88
      %p91 = scmp.ne.s32.totalorder %s76, %s90
      %p92 = scmp.eq.s32.totalorder %s24, 0
      %p93 = por %p91, %p92
      %s95 = sadd.s32 %s94, 1
      %p98 = scmp.eq.s32.totalorder %s18, 1
      %p99 = scmp.ne.s32.totalorder %s94, %s96
      %p100 = scmp.eq.s32.totalorder %s18, 0
      %p101 = por %p99, %p100
      %p102 = scmp.ne.s32.totalorder %s94, %s96
      %p103 = scmp.eq.s32.totalorder %s23, 1
      %p104 = por %p102, %p103
      %p105 = scmp.ne.s32.totalorder %s96, %s97
      %p106 = scmp.eq.s32.totalorder %s23, 0
      %p107 = por %p105, %p106
      %p108 = scmp.ne.s32.totalorder %s96, %s97
      %p109 = scmp.eq.s32.totalorder %s24, 1
      %p110 = por %p108, %p109
      %p112 = scmp.ne.s32.totalorder %s97, %s111
      %p113 = scmp.eq.s32.totalorder %s24, 0
      %p114 = por %p112, %p113
      %s116 = sadd.s32 %s115, 1
      %p119 = scmp.eq.s32.totalorder %s18, 1
      %p120 = scmp.ne.s32.totalorder %s115, %s117
      %p121 = scmp.eq.s32.totalorder %s18, 0
      %p122 = por %p120, %p121
      %p123 = scmp.ne.s32.totalorder %s115, %s117
      %p124 = scmp.eq.s32.totalorder %s23, 1
      %p125 = por %p123, %p124
      %p126 = scmp.ne.s32.totalorder %s117, %s118
      %p127 = scmp.eq.s32.totalorder %s23, 0
      %p128 = por %p126, %p127
      %p129 = scmp.ne.s32.totalorder %s117, %s118
      %p130 = scmp.eq.s32.totalorder %s24, 1
      %p131 = por %p129, %p130
      %p133 = scmp.ne.s32.totalorder %s118, %s132
      %p134 = scmp.eq.s32.totalorder %s24, 0
      %p135 = por %p133, %p134
      %s137 = sadd.s32 %s136, 1
      %p140 = scmp.eq.s32.totalorder %s18, 1
      %p141 = scmp.ne.s32.totalorder %s136, %s138
      %p142 = scmp.eq.s32.totalorder %s18, 0
      %p143 = por %p141, %p142
      %p144 = scmp.ne.s32.totalorder %s136, %s138
      %p145 = scmp.eq.s32.totalorder %s23, 1
      %p146 = por %p144, %p145
      %p147 = scmp.ne.s32.totalorder %s138, %s139
      %p148 = scmp.eq.s32.totalorder %s23, 0
      %p149 = por %p147, %p148
      %p150 = scmp.ne.s32.totalorder %s138, %s139
      %p151 = scmp.eq.s32.totalorder %s24, 1
      %p152 = por %p150, %p151
      %p154 = scmp.ne.s32.totalorder %s139, %s153
      %p155 = scmp.eq.s32.totalorder %s24, 0
      %p156 = por %p154, %p155
      %s158 = sadd.s32 %s157, 1
      %p161 = scmp.eq.s32.totalorder %s18, 1
      %p162 = scmp.ne.s32.totalorder %s157, %s159
      %p163 = scmp.eq.s32.totalorder %s18, 0
      %p164 = por %p162, %p163
      %p165 = scmp.ne.s32.totalorder %s157, %s159
      %p166 = scmp.eq.s32.totalorder %s23, 1
      %p167 = por %p165, %p166
      %p168 = scmp.ne.s32.totalorder %s159, %s160
      %p169 = scmp.eq.s32.totalorder %s23, 0
      %p170 = por %p168, %p169
      %p171 = scmp.ne.s32.totalorder %s159, %s160
      %p172 = scmp.eq.s32.totalorder %s24, 1
      %p173 = por %p171, %p172
      %p175 = scmp.ne.s32.totalorder %s160, %s174
      %p176 = scmp.eq.s32.totalorder %s24, 0
      %p177 = por %p175, %p176
      %s178 = ssub.s32 %s18, %s25
      %p179 = scmp.eq.s32.totalorder %s178, 0
      %s181 = sadd.s32 %s180, 1
      %s182 = scalar_select %p179, %s180, %s181
      %p185 = pneg %p179
      %p186 = scmp.eq.s32.totalorder %s18, 1
      %p187 = por %p185, %p186
      %p188 = scmp.ne.s32.totalorder %s180, %s183
      %p189 = scmp.eq.s32.totalorder %s18, 0
      %p190 = por %p188, %p189
      %p191 = scmp.ne.s32.totalorder %s180, %s183
      %p192 = scmp.eq.s32.totalorder %s23, 1
      %p193 = por %p191, %p192
      %p194 = scmp.ne.s32.totalorder %s183, %s184
      %p195 = scmp.eq.s32.totalorder %s23, 0
      %p196 = por %p194, %p195
      %p197 = scmp.ne.s32.totalorder %s183, %s184
      %p198 = scmp.eq.s32.totalorder %s24, 1
      %p199 = por %p197, %p198
      %p201 = scmp.ne.s32.totalorder %s184, %s200
      %p202 = scmp.eq.s32.totalorder %s24, 0
      %p203 = por %p201, %p202
      %p204 = scmp.le.s32.totalorder 1, %s18
      %p205 = scmp.lt.s32.totalorder %s18, 3
      %p206 = pnand %p204, %p205
      %p207 = pneg %p206
      // Predicated region
      $region9: #{tpu_custom_call.1} parent=5 // pred_check
        _
      $region10: #{tpu_custom_call.1} parent=5 // pred_check_branch
        %209 = sbr.rel (%p206) target = $region12
      $region11: #{tpu_custom_call.1} parent=5 // pred_region
        %s210 = ssub.s32 %s18, 1
        // Predicated region
        $region13: #{tpu_custom_call.1} parent=11 // pred_check
          %p211 = pneg %p65
        $region14: #{tpu_custom_call.1} parent=11 // pred_check_branch
          %213 = sbr.rel (%p211) target = $region16
        $region15: #{tpu_custom_call.1} parent=11 // pred_region
          _
        $region16: #{tpu_custom_call.1} parent=11 // pred_fallthru
          _
        // Predicated region
        $region17: #{tpu_custom_call.1} parent=11 // pred_check
          %p214 = pneg %p86
        $region18: #{tpu_custom_call.1} parent=11 // pred_check_branch
          %216 = sbr.rel (%p214) target = $region20
        $region19: #{tpu_custom_call.1} parent=11 // pred_region
          _
        $region20: #{tpu_custom_call.1} parent=11 // pred_fallthru
          _
        // Predicated region
        $region21: #{tpu_custom_call.1} parent=11 // pred_check
          %p217 = pneg %p107
        $region22: #{tpu_custom_call.1} parent=11 // pred_check_branch
          %219 = sbr.rel (%p217) target = $region24
        $region23: #{tpu_custom_call.1} parent=11 // pred_region
          %s221 = ssub.s32 1024, 1024
          %222 = vsyncadd [#allocation3], %s221
          %s223 = sshll.u32 [#allocation2], 4
          %s224 = int_to_ptr.vmem [resolvable:$true] %s223
          %229 = dma.hbm_to_vmem [thread:$0]  %s3, 1024, %s224, [#allocation3], 64, 64, 4
        $region24: #{tpu_custom_call.1} parent=11 // pred_fallthru
          _
        // Predicated region
        $region25: #{tpu_custom_call.1} parent=11 // pred_check
          %p230 = pneg %p128
        $region26: #{tpu_custom_call.1} parent=11 // pred_check_branch
          %232 = sbr.rel (%p230) target = $region28
        $region27: #{tpu_custom_call.1} parent=11 // pred_region
          _
        $region28: #{tpu_custom_call.1} parent=11 // pred_fallthru
          _
        // Predicated region
        $region29: #{tpu_custom_call.1} parent=11 // pred_check
          %p233 = pneg %p149
        $region30: #{tpu_custom_call.1} parent=11 // pred_check_branch
          %235 = sbr.rel (%p233) target = $region32
        $region31: #{tpu_custom_call.1} parent=11 // pred_region
          %s237 = ssub.s32 1024, 1024
          %238 = vsyncadd [#allocation6], %s237
          %s239 = sshll.u32 [#allocation5], 4
          %s240 = int_to_ptr.vmem [resolvable:$true] %s239
          %245 = dma.hbm_to_vmem [thread:$0]  %s5, 1024, %s240, [#allocation6], 64, 64, 4
        $region32: #{tpu_custom_call.1} parent=11 // pred_fallthru
          _
        // Predicated region
        $region33: #{tpu_custom_call.1} parent=11 // pred_check
          %p246 = pneg %p170
        $region34: #{tpu_custom_call.1} parent=11 // pred_check_branch
          %248 = sbr.rel (%p246) target = $region36
        $region35: #{tpu_custom_call.1} parent=11 // pred_region
          _
        $region36: #{tpu_custom_call.1} parent=11 // pred_fallthru
          _
      $region12: #{tpu_custom_call.1} parent=5 // pred_fallthru
        _
      %p249 = scmp.lt.s32.totalorder %s18, 2
      // Predicated region
      $region37: #{tpu_custom_call.1} parent=5 // pred_check
        %p250 = pneg %p249
      $region38: #{tpu_custom_call.1} parent=5 // pred_check_branch
        %252 = sbr.rel (%p250) target = $region40
      $region39: #{tpu_custom_call.1} parent=5 // pred_region
        // Predicated region
        $region41: #{tpu_custom_call.1} parent=39 // pred_check
          %p253 = pneg %p38
        $region42: #{tpu_custom_call.1} parent=39 // pred_check_branch
          %255 = sbr.rel (%p253) target = $region44
        $region43: #{tpu_custom_call.1} parent=39 // pred_region
          %p256 = scmp.lt.s32.totalorder %s18, 1
          %s257 = scalar_select %p256, %s18, 1
          %s258 = smul.addr %s257, 4
          %s259 = scalar_lea.vmem %s0, %s258
        $region44: #{tpu_custom_call.1} parent=39 // pred_fallthru
          _
      $region40: #{tpu_custom_call.1} parent=5 // pred_fallthru
        _
      %p260 = scmp.le.s32.totalorder 1, %s18
      %p261 = scmp.lt.s32.totalorder %s18, 3
      %p262 = pnand %p260, %p261
      %p263 = pneg %p262
      // Predicated region
      $region45: #{tpu_custom_call.1} parent=5 // pred_check
        _
      $region46: #{tpu_custom_call.1} parent=5 // pred_check_branch
        %265 = sbr.rel (%p262) target = $region48
      $region47: #{tpu_custom_call.1} parent=5 // pred_region
        %s266 = ssub.s32 %s18, 1
        // Predicated region
        $region49: #{tpu_custom_call.1} parent=47 // pred_check
          %p267 = pneg %p107
        $region50: #{tpu_custom_call.1} parent=47 // pred_check_branch
          %269 = sbr.rel (%p267) target = $region52
        $region51: #{tpu_custom_call.1} parent=47 // pred_region
          %270 = dma.done [#allocation3], 1024
        $region52: #{tpu_custom_call.1} parent=47 // pred_fallthru
          _
        // Predicated region
        $region53: #{tpu_custom_call.1} parent=47 // pred_check
          %p271 = pneg %p149
        $region54: #{tpu_custom_call.1} parent=47 // pred_check_branch
          %273 = sbr.rel (%p271) target = $region56
        $region55: #{tpu_custom_call.1} parent=47 // pred_region
          %274 = dma.done [#allocation6], 1024
        $region56: #{tpu_custom_call.1} parent=47 // pred_fallthru
          _
        %p275 = scmp.lt.s32.totalorder %s23, 1
        %s276 = scalar_select %p275, %s23, 1
        %s277 = smul.addr %s276, 4
        %s278 = scalar_lea.vmem %s0, %s277
        %p279 = pneg %p44
        %p280 = pneg %p41
        %p281 = pneg %p65
        %p282 = pneg %p62
        %p283 = pneg %p86
        %p284 = pneg %p83
        %p285 = pneg %p107
        %p286 = pneg %p104
        %p287 = pneg %p128
        %p288 = pneg %p125
        %p289 = pneg %p149
        %p290 = pneg %p146
        %p291 = pneg %p170
        %p292 = pneg %p167
        %p293 = pneg %p196
        %p294 = pneg %p193
        %s295 = sand.u32 %s183, 1
        %s296 = scalar_lea.sflag [#allocation4], %s295
        %s297 = sand.u32 %s183, 1
        %s298 = smul.addr %s297, 8
        %s299 = scalar_lea.vmem [#allocation7], %s298
        %p300 = scmp.lt.s32.totalorder %s23, 1
        %s301 = scalar_select %p300, %s23, 1
        %s302 = smul.addr %s301, 4
        %s303 = scalar_lea.vmem %s0, %s302
        %v305 = vld [vmem:[%s303] sm:$0xf]
        %v306 = vld [vmem:[%s1] sm:$0x3]
        %v307 = vld [vmem:[%s2] sm:$0x1]
        %v309 = vlaneseq
        %v310 = vshrl.u32 %v309, 7
        %v311 = vsub.s32 0, %v310
        %v312 = vrot.slane %v307, %v311
        %vm314 = vcmask 31744
        %v316 = vsel %vm314, %v305, 0
        %vm318 = vcmask 1041408
        %v320 = vsel %vm318, %v306, 0
        %322 = vmatprep.subr.bf16.mxu0 0
        %323 = vmatpush1.bf16.msra.mxu0 %v320
        %324 = vmatprep.subr.bf16.mxu0 0
        %325 = vmatpush1.bf16.msra.mxu0 0
        %326 = vmatprep.subr.bf16.mxu0 0
        %327 = vmatpush1.bf16.msra.mxu0 0
        %328 = vmatprep.subr.bf16.mxu0 0
        %329 = vmatpush1.bf16.msra.mxu0 0
        %330 = vmatprep.subr.bf16.mxu0 0
        %331 = vmatpush1.bf16.msra.mxu0 0
        %332 = vmatprep.subr.bf16.mxu0 0
        %333 = vmatpush1.bf16.msra.mxu0 0
        %334 = vmatprep.subr.bf16.mxu0 0
        %335 = vmatpush1.bf16.msra.mxu0 0
        %336 = vmatprep.subr.bf16.mxu0 0
        %337 = vmatpush1.bf16.msra.mxu0 0
        %338 = vmatprep.subr.bf16.mxu0 0
        %339 = vmatpush1.bf16.msra.mxu0 0
        %340 = vmatprep.subr.bf16.mxu0 0
        %341 = vmatpush1.bf16.msra.mxu0 0
        %342 = vmatprep.subr.bf16.mxu0 0
        %343 = vmatpush1.bf16.msra.mxu0 0
        %344 = vmatprep.subr.bf16.mxu0 0
        %345 = vmatpush1.bf16.msra.mxu0 0
        %346 = vmatprep.subr.bf16.mxu0 0
        %347 = vmatpush1.bf16.msra.mxu0 0
        %348 = vmatprep.subr.bf16.mxu0 0
        %349 = vmatpush1.bf16.msra.mxu0 0
        %350 = vmatprep.subr.bf16.mxu0 0
        %351 = vmatpush1.bf16.msra.mxu0 0
        %352 = vmatprep.subr.bf16.mxu0 0
        %353 = vmatpush1.bf16.msra.mxu0 0
        %354 = vmatprep.mubr.bf16.mxu0 0
        %355 = vmatmul.mubr.bf16.gmra.mrb[0].mxu0 %v316
        %v356 = vpop.f32.mrb[0].mxu0
        %v357 = vadd.f32 %v312, %v356
        %v358 = vpop.f32.mrb[0].mxu0
        %v359 = vpop.f32.mrb[0].mxu0
        %v360 = vpop.f32.mrb[0].mxu0
        %361 = vdwg.mxu0
        %v362 = vmax.f32 %v357, 0.0
        %v363 = vld [vmem:[#allocation2] sm:$0xf]
        %v364 = vld [vmem:[#allocation2 + $0x4] sm:$0xf]
        %v365 = vld [vmem:[#allocation2 + $0x8] sm:$0xf]
        %v366 = vld [vmem:[#allocation2 + $0xc] sm:$0xf]
        %v367 = vld [vmem:[#allocation2 + $0x10] sm:$0xf]
        %v368 = vld [vmem:[#allocation2 + $0x14] sm:$0xf]
        %v369 = vld [vmem:[#allocation2 + $0x18] sm:$0xf]
        %v370 = vld [vmem:[#allocation2 + $0x1c] sm:$0xf]
        %v371 = vld [vmem:[#allocation2 + $0x20] sm:$0xf]
        %v372 = vld [vmem:[#allocation2 + $0x24] sm:$0xf]
        %v373 = vld [vmem:[#allocation2 + $0x28] sm:$0xf]
        %v374 = vld [vmem:[#allocation2 + $0x2c] sm:$0xf]
        %v375 = vld [vmem:[#allocation2 + $0x30] sm:$0xf]
        %v376 = vld [vmem:[#allocation2 + $0x34] sm:$0xf]
        %v377 = vld [vmem:[#allocation2 + $0x38] sm:$0xf]
        %v378 = vld [vmem:[#allocation2 + $0x3c] sm:$0xf]
        %v379 = vld [vmem:[%s4] sm:$0x1]
        %v380 = vpack.c.bf16 %v362, %v362
        %v382 = vlaneseq
        %v383 = vshrl.u32 %v382, 7
        %v384 = vsub.s32 0, %v383
        %v385 = vrot.slane %v379, %v384
        %v403 = vunpack.c.l.b16 %v363
        %v404 = vunpack.c.l.b16 %v364
        %v405 = vunpack.c.l.b16 %v365
        %v406 = vunpack.c.l.b16 %v366
        %v407 = vunpack.c.l.b16 %v367
        %v408 = vunpack.c.l.b16 %v368
        %v409 = vunpack.c.l.b16 %v369
        %v410 = vunpack.c.l.b16 %v370
        %v411 = vunpack.c.l.b16 %v371
        %v412 = vunpack.c.l.b16 %v372
        %v413 = vunpack.c.l.b16 %v373
        %v414 = vunpack.c.l.b16 %v374
        %v415 = vunpack.c.l.b16 %v375
        %v416 = vunpack.c.l.b16 %v376
        %v417 = vunpack.c.l.b16 %v377
        %v418 = vunpack.c.l.b16 %v378
        %v419 = vpack.c.b16 %v404, %v403
        %v420 = vpack.c.b16 %v406, %v405
        %v421 = vpack.c.b16 %v408, %v407
        %v422 = vpack.c.b16 %v410, %v409
        %v423 = vpack.c.b16 %v412, %v411
        %v424 = vpack.c.b16 %v414, %v413
        %v425 = vpack.c.b16 %v416, %v415
        %v426 = vpack.c.b16 %v418, %v417
        %435 = vmatprep.subr.bf16.mxu0 0
        %436 = vmatpush1.bf16.msra.mxu0 %v419
        %437 = vmatprep.subr.bf16.mxu0 0
        %438 = vmatpush1.bf16.msra.mxu0 %v420
        %439 = vmatprep.subr.bf16.mxu0 0
        %440 = vmatpush1.bf16.msra.mxu0 %v421
        %441 = vmatprep.subr.bf16.mxu0 0
        %442 = vmatpush1.bf16.msra.mxu0 %v422
        %443 = vmatprep.subr.bf16.mxu0 0
        %444 = vmatpush1.bf16.msra.mxu0 %v423
        %445 = vmatprep.subr.bf16.mxu0 0
        %446 = vmatpush1.bf16.msra.mxu0 %v424
        %447 = vmatprep.subr.bf16.mxu0 0
        %448 = vmatpush1.bf16.msra.mxu0 %v425
        %449 = vmatprep.subr.bf16.mxu0 0
        %450 = vmatpush1.bf16.msra.mxu0 %v426
        %451 = vmatprep.subr.bf16.mxu0 0
        %452 = vmatpush1.bf16.msra.mxu0 0
        %453 = vmatprep.subr.bf16.mxu0 0
        %454 = vmatpush1.bf16.msra.mxu0 0
        %455 = vmatprep.subr.bf16.mxu0 0
        %456 = vmatpush1.bf16.msra.mxu0 0
        %457 = vmatprep.subr.bf16.mxu0 0
        %458 = vmatpush1.bf16.msra.mxu0 0
        %459 = vmatprep.subr.bf16.mxu0 0
        %460 = vmatpush1.bf16.msra.mxu0 0
        %461 = vmatprep.subr.bf16.mxu0 0
        %462 = vmatpush1.bf16.msra.mxu0 0
        %463 = vmatprep.subr.bf16.mxu0 0
        %464 = vmatpush1.bf16.msra.mxu0 0
        %465 = vmatprep.subr.bf16.mxu0 0
        %466 = vmatpush1.bf16.msra.mxu0 0
        %467 = vmatprep.mubr.bf16.mxu0 0
        %468 = vmatmul.mubr.bf16.gmra.mrb[0].mxu0 %v380
        %v469 = vpop.f32.mrb[0].mxu0
        %v470 = vadd.f32 %v385, %v469
        %v471 = vpop.f32.mrb[0].mxu0
        %v472 = vpop.f32.mrb[0].mxu0
        %v473 = vpop.f32.mrb[0].mxu0
        %474 = vdwg.mxu0
        %v475 = vmax.f32 %v470, 0.0
        %v476 = vld [vmem:[#allocation5] sm:$0xf]
        %v477 = vld [vmem:[#allocation5 + $0x4] sm:$0xf]
        %v478 = vld [vmem:[#allocation5 + $0x8] sm:$0xf]
        %v479 = vld [vmem:[#allocation5 + $0xc] sm:$0xf]
        %v480 = vld [vmem:[#allocation5 + $0x10] sm:$0xf]
        %v481 = vld [vmem:[#allocation5 + $0x14] sm:$0xf]
        %v482 = vld [vmem:[#allocation5 + $0x18] sm:$0xf]
        %v483 = vld [vmem:[#allocation5 + $0x1c] sm:$0xf]
        %v484 = vld [vmem:[#allocation5 + $0x20] sm:$0xf]
        %v485 = vld [vmem:[#allocation5 + $0x24] sm:$0xf]
        %v486 = vld [vmem:[#allocation5 + $0x28] sm:$0xf]
        %v487 = vld [vmem:[#allocation5 + $0x2c] sm:$0xf]
        %v488 = vld [vmem:[#allocation5 + $0x30] sm:$0xf]
        %v489 = vld [vmem:[#allocation5 + $0x34] sm:$0xf]
        %v490 = vld [vmem:[#allocation5 + $0x38] sm:$0xf]
        %v491 = vld [vmem:[#allocation5 + $0x3c] sm:$0xf]
        %v492 = vld [vmem:[%s6] sm:$0x1]
        %v493 = vpack.c.bf16 %v475, %v475
        %v495 = vlaneseq
        %v496 = vshrl.u32 %v495, 7
        %v497 = vsub.s32 0, %v496
        %v498 = vrot.slane %v492, %v497
        %v516 = vunpack.c.l.b16 %v476
        %v517 = vunpack.c.l.b16 %v477
        %v518 = vunpack.c.l.b16 %v478
        %v519 = vunpack.c.l.b16 %v479
        %v520 = vunpack.c.l.b16 %v480
        %v521 = vunpack.c.l.b16 %v481
        %v522 = vunpack.c.l.b16 %v482
        %v523 = vunpack.c.l.b16 %v483
        %v524 = vunpack.c.l.b16 %v484
        %v525 = vunpack.c.l.b16 %v485
        %v526 = vunpack.c.l.b16 %v486
        %v527 = vunpack.c.l.b16 %v487
        %v528 = vunpack.c.l.b16 %v488
        %v529 = vunpack.c.l.b16 %v489
        %v530 = vunpack.c.l.b16 %v490
        %v531 = vunpack.c.l.b16 %v491
        %v532 = vpack.c.b16 %v517, %v516
        %v533 = vpack.c.b16 %v519, %v518
        %v534 = vpack.c.b16 %v521, %v520
        %v535 = vpack.c.b16 %v523, %v522
        %v536 = vpack.c.b16 %v525, %v524
        %v537 = vpack.c.b16 %v527, %v526
        %v538 = vpack.c.b16 %v529, %v528
        %v539 = vpack.c.b16 %v531, %v530
        %548 = vmatprep.subr.bf16.mxu0 0
        %549 = vmatpush1.bf16.msra.mxu0 %v532
        %550 = vmatprep.subr.bf16.mxu0 0
        %551 = vmatpush1.bf16.msra.mxu0 %v533
        %552 = vmatprep.subr.bf16.mxu0 0
        %553 = vmatpush1.bf16.msra.mxu0 %v534
        %554 = vmatprep.subr.bf16.mxu0 0
        %555 = vmatpush1.bf16.msra.mxu0 %v535
        %556 = vmatprep.subr.bf16.mxu0 0
        %557 = vmatpush1.bf16.msra.mxu0 %v536
        %558 = vmatprep.subr.bf16.mxu0 0
        %559 = vmatpush1.bf16.msra.mxu0 %v537
        %560 = vmatprep.subr.bf16.mxu0 0
        %561 = vmatpush1.bf16.msra.mxu0 %v538
        %562 = vmatprep.subr.bf16.mxu0 0
        %563 = vmatpush1.bf16.msra.mxu0 %v539
        %564 = vmatprep.subr.bf16.mxu0 0
        %565 = vmatpush1.bf16.msra.mxu0 0
        %566 = vmatprep.subr.bf16.mxu0 0
        %567 = vmatpush1.bf16.msra.mxu0 0
        %568 = vmatprep.subr.bf16.mxu0 0
        %569 = vmatpush1.bf16.msra.mxu0 0
        %570 = vmatprep.subr.bf16.mxu0 0
        %571 = vmatpush1.bf16.msra.mxu0 0
        %572 = vmatprep.subr.bf16.mxu0 0
        %573 = vmatpush1.bf16.msra.mxu0 0
        %574 = vmatprep.subr.bf16.mxu0 0
        %575 = vmatpush1.bf16.msra.mxu0 0
        %576 = vmatprep.subr.bf16.mxu0 0
        %577 = vmatpush1.bf16.msra.mxu0 0
        %578 = vmatprep.subr.bf16.mxu0 0
        %579 = vmatpush1.bf16.msra.mxu0 0
        %580 = vmatprep.mubr.bf16.mxu0 0
        %581 = vmatmul.mubr.bf16.gmra.mrb[0].mxu0 %v493
        %v582 = vpop.f32.mrb[0].mxu0
        %v583 = vadd.f32 %v498, %v582
        %v584 = vpop.f32.mrb[0].mxu0
        %v585 = vpop.f32.mrb[0].mxu0
        %v586 = vpop.f32.mrb[0].mxu0
        %587 = vdwg.mxu0
        %588 = vst [vmem:[%s299] sm:$0xff] %v583
        %s589 = sand.u32 %s183, 1
        %s590 = scalar_lea.sflag [#allocation4], %s589
        %s591 = sand.u32 %s183, 1
        %s592 = smul.addr %s591, 8
        %s593 = scalar_lea.vmem [#allocation7], %s592
        // Predicated region
        $region57: #{tpu_custom_call.1} parent=47 // pred_check
          %p594 = pneg %p193
        $region58: #{tpu_custom_call.1} parent=47 // pred_check_branch
          %596 = sbr.rel (%p594) target = $region60
        $region59: #{tpu_custom_call.1} parent=47 // pred_region
          %s598 = ssub.s32 128, 128
          %599 = vsyncadd %s590, %s598
          %s600 = smul.addr %s23, 128
          %s601 = scalar_lea.hbm %s7, %s600
          %s603 = sshll.u32 %s593, 4
          %s604 = int_to_ptr.vmem [resolvable:$true] %s603
          %606 = dma.vmem_to_hbm [thread:$0]  %s604, 128, %s601, %s590
        $region60: #{tpu_custom_call.1} parent=47 // pred_fallthru
          _
      $region48: #{tpu_custom_call.1} parent=5 // pred_fallthru
        _
      %p607 = scmp.le.s32.totalorder 2, %s18
      // Predicated region
      $region61: #{tpu_custom_call.1} parent=5 // pred_check
        %p608 = pneg %p607
      $region62: #{tpu_custom_call.1} parent=5 // pred_check_branch
        %610 = sbr.rel (%p608) target = $region64
      $region63: #{tpu_custom_call.1} parent=5 // pred_region
        %s611 = ssub.s32 %s18, 2
        // Predicated region
        $region65: #{tpu_custom_call.1} parent=63 // pred_check
          %p612 = pneg %p199
        $region66: #{tpu_custom_call.1} parent=63 // pred_check_branch
          %614 = sbr.rel (%p612) target = $region68
        $region67: #{tpu_custom_call.1} parent=63 // pred_region
          %s615 = sand.u32 %s184, 1
          %s616 = scalar_lea.sflag [#allocation4], %s615
          %s617 = sand.u32 %s184, 1
          %s618 = smul.addr %s617, 8
          %s619 = scalar_lea.vmem [#allocation7], %s618
          %620 = dma.done %s616, 128
        $region68: #{tpu_custom_call.1} parent=63 // pred_fallthru
          _
      $region64: #{tpu_custom_call.1} parent=5 // pred_fallthru
        _
    $region6: #{tpu_custom_call.1} parent=1 // loop_footer
      %s22 = sadd.s32 1, %s18
    $region7: #{tpu_custom_call.1} parent=1 // loop_footer_branch
      %17 = sbr.rel target = $region3
    $region8: #{tpu_custom_call.1} parent=1 // loop_exit
      _
    %621 = vsyncpa [#allocation3], 1
    %s622 = scalar_lea.sflag [#allocation3], 1
    %623 = vsyncpa %s622, 1
    %624 = vsyncpa [#allocation6], 1
    %625 = vsyncpa [#allocation4], 1
    %s626 = scalar_lea.sflag [#allocation4], 1
    %627 = vsyncpa %s626, 1

// kernel: tpu_custom_call.1
$region0: #{tpu_custom_call.1}
  #allocation0 [shape = 'u32[]', space=smem, size = 0x4, offset = 0x4, fixed_abs, tag = 'smem constant byte address 0x4 - core index']
  #allocation1 [shape = 'u32[144,128]{1,0:T(1,128)}', space=vmem, size = 0x12000, scoped, tag = 'internal scratch']
  %s0 = inlined_call_operand.vmem [shape: bf16[16,4], index: 0, kind: input, shape index: {}]
  %s1 = inlined_call_operand.vmem [shape: bf16[4,128], index: 1, kind: input, shape index: {}]
  %s2 = inlined_call_operand.vmem [shape: f32[1,128], index: 2, kind: input, shape index: {}]
  %s3 = inlined_call_operand.hbm [shape: bf16[128,128], index: 3, kind: input, shape index: {}]
  %s4 = inlined_call_operand.vmem [shape: f32[1,128], index: 4, kind: input, shape index: {}]
  %s5 = inlined_call_operand.hbm [shape: bf16[128,128], index: 5, kind: input, shape index: {}]
  %s6 = inlined_call_operand.vmem [shape: f32[1,128], index: 6, kind: input, shape index: {}]
  %s7 = inlined_call_operand.hbm [shape: f32[16,128], index: 7, kind: output, shape index: {}]
  %s8 = sld [smem:[#allocation0]]
  $region69: #{tpu_custom_call.1} parent=0
    _
  %s10 = ssub.s32 1, %s8
  %s11 = scalar_select 0, %s10, %s8
  $region1: #{tpu_custom_call.1} parent=0
    #allocation2 [shape = 'u8[32768]{0}', space=vmem, size = 0x8000, scoped, tag = 'input window, operand 3, single buffered']
    #allocation3 [shape = 's32[2]{0}', space=sflag, size = 0x8, scoped, tag = 'scoped memory for tpu_custom_call.1']
    #allocation4 [shape = 's32[2]{0}', space=sflag, size = 0x8, scoped, tag = 'scoped memory for tpu_custom_call.1']
    #allocation5 [shape = 'u8[32768]{0}', space=vmem, size = 0x8000, scoped, tag = 'input window, operand 5, single buffered']
    #allocation6 [shape = 's32[1]{0}', space=sflag, size = 0x4, scoped, tag = 'scoped memory for tpu_custom_call.1']
    #allocation7 [shape = 'u8[8192]{0}', space=vmem, size = 0x2000, scoped, tag = 'output window, operand 0']
    %12 = vsyncpa [#allocation3], 0
    %13 = vsyncpa [#allocation6], 0
    %14 = vsyncpa [#allocation4], 0
    %s15 = scalar_lea.sflag [#allocation4], 1
    %16 = vsyncpa %s15, 0
    loop: start=0, step=1, limit=4
    $region2: #{tpu_custom_call.1} parent=1 // loop_pre_header
      _
    $region3: #{tpu_custom_call.1} parent=1 // loop_header
      %s18 = sphi 0, %s22
      %p19 = scmp.ge.s32.totalorder %s18, 4
      %s28 = sphi 0, %s30
      %s31 = sphi 0, %s28
      %s32 = sphi 0, %s31
      %s48 = sphi 0, %s32
      %s52 = sphi 0, %s52
      %s54 = sphi 0, %s52
      %s55 = sphi 0, %s54
      %s69 = sphi 0, %s55
      %s73 = sphi 0, %s73
      %s75 = sphi 0, %s73
      %s76 = sphi 0, %s75
      %s90 = sphi 0, %s76
      %s94 = sphi 0, %s94
      %s96 = sphi 0, %s94
      %s97 = sphi 0, %s96
      %s111 = sphi 0, %s97
      %s115 = sphi 0, %s115
      %s117 = sphi 0, %s115
      %s118 = sphi 0, %s117
      %s132 = sphi 0, %s118
      %s136 = sphi 0, %s136
      %s138 = sphi 0, %s136
      %s139 = sphi 0, %s138
      %s153 = sphi 0, %s139
      %s157 = sphi 0, %s157
      %s159 = sphi 0, %s157
      %s160 = sphi 0, %s159
      %s174 = sphi 0, %s160
      %s180 = sphi 0, %s182
      %s183 = sphi 0, %s180
      %s184 = sphi 0, %s183
      %s200 = sphi 0, %s184
    $region4: #{tpu_custom_call.1} parent=1 // loop_header_branch
      %21 = sbr.rel (%p19) target = $region8
    $region5: #{tpu_custom_call.1} parent=1 // loop_body
      %s23 = ssub.s32 %s18, 1
      %s24 = ssub.s32 %s18, 2
      %s25 = sadd.s32 %s18, 1
      %s26 = ssub.s32 %s18, %s25
      %p27 = scmp.eq.s32.totalorder %s26, 0
      %s29 = sadd.s32 %s28, 1
      %s30 = scalar_select %p27, %s28, %s29
      %p33 = pneg %p27
      %p34 = scmp.eq.s32.totalorder %s18, 1
      %p35 = por %p33, %p34
      %p36 = scmp.ne.s32.totalorder %s28, %s31
      %p37 = scmp.eq.s32.totalorder %s18, 0
      %p38 = por %p36, %p37
      %p39 = scmp.ne.s32.totalorder %s28, %s31
      %p40 = scmp.eq.s32.totalorder %s23, 1
      %p41 = por %p39, %p40
      %p42 = scmp.ne.s32.totalorder %s31, %s32
      %p43 = scmp.eq.s32.totalorder %s23, 0
      %p44 = por %p42, %p43
      %p45 = scmp.ne.s32.totalorder %s31, %s32
      %p46 = scmp.eq.s32.totalorder %s24, 1
      %p47 = por %p45, %p46
      %p49 = scmp.ne.s32.totalorder %s32, %s48
      %p50 = scmp.eq.s32.totalorder %s24, 0
      %p51 = por %p49, %p50
      %s53 = sadd.s32 %s52, 1
      %p56 = scmp.eq.s32.totalorder %s18, 1
      %p57 = scmp.ne.s32.totalorder %s52, %s54
      %p58 = scmp.eq.s32.totalorder %s18, 0
      %p59 = por %p57, %p58
      %p60 = scmp.ne.s32.totalorder %s52, %s54
      %p61 = scmp.eq.s32.totalorder %s23, 1
      %p62 = por %p60, %p61
      %p63 = scmp.ne.s32.totalorder %s54, %s55
      %p64 = scmp.eq.s32.totalorder %s23, 0
      %p65 = por %p63, %p64
      %p66 = scmp.ne.s32.totalorder %s54, %s55
      %p67 = scmp.eq.s32.totalorder %s24, 1
      %p68 = por %p66, %p67
      %p70 = scmp.ne.s32.totalorder %s55, %s69
      %p71 = scmp.eq.s32.totalorder %s24, 0
      %p72 = por %p70, %p71
      %s74 = sadd.s32 %s73, 1
      %p77 = scmp.eq.s32.totalorder %s18, 1
      %p78 = scmp.ne.s32.totalorder %s73, %s75
      %p79 = scmp.eq.s32.totalorder %s18, 0
      %p80 = por %p78, %p79
      %p81 = scmp.ne.s32.totalorder %s73, %s75
      %p82 = scmp.eq.s32.totalorder %s23, 1
      %p83 = por %p81, %p82
      %p84 = scmp.ne.s32.totalorder %s75, %s76
      %p85 = scmp.eq.s32.totalorder %s23, 0
      %p86 = por %p84, %p85
      %p87 = scmp.ne.s32.totalorder %s75, %s76
      %p88 = scmp.eq.s32.totalorder %s24, 1
      %p89 = por %p87, %p88
      %p91 = scmp.ne.s32.totalorder %s76, %s90
      %p92 = scmp.eq.s32.totalorder %s24, 0
      %p93 = por %p91, %p92
      %s95 = sadd.s32 %s94, 1
      %p98 = scmp.eq.s32.totalorder %s18, 1
      %p99 = scmp.ne.s32.totalorder %s94, %s96
      %p100 = scmp.eq.s32.totalorder %s18, 0
      %p101 = por %p99, %p100
      %p102 = scmp.ne.s32.totalorder %s94, %s96
      %p103 = scmp.eq.s32.totalorder %s23, 1
      %p104 = por %p102, %p103
      %p105 = scmp.ne.s32.totalorder %s96, %s97
      %p106 = scmp.eq.s32.totalorder %s23, 0
      %p107 = por %p105, %p106
      %p108 = scmp.ne.s32.totalorder %s96, %s97
      %p109 = scmp.eq.s32.totalorder %s24, 1
      %p110 = por %p108, %p109
      %p112 = scmp.ne.s32.totalorder %s97, %s111
      %p113 = scmp.eq.s32.totalorder %s24, 0
      %p114 = por %p112, %p113
      %s116 = sadd.s32 %s115, 1
      %p119 = scmp.eq.s32.totalorder %s18, 1
      %p120 = scmp.ne.s32.totalorder %s115, %s117
      %p121 = scmp.eq.s32.totalorder %s18, 0
      %p122 = por %p120, %p121
      %p123 = scmp.ne.s32.totalorder %s115, %s117
      %p124 = scmp.eq.s32.totalorder %s23, 1
      %p125 = por %p123, %p124
      %p126 = scmp.ne.s32.totalorder %s117, %s118
      %p127 = scmp.eq.s32.totalorder %s23, 0
      %p128 = por %p126, %p127
      %p129 = scmp.ne.s32.totalorder %s117, %s118
      %p130 = scmp.eq.s32.totalorder %s24, 1
      %p131 = por %p129, %p130
      %p133 = scmp.ne.s32.totalorder %s118, %s132
      %p134 = scmp.eq.s32.totalorder %s24, 0
      %p135 = por %p133, %p134
      %s137 = sadd.s32 %s136, 1
      %p140 = scmp.eq.s32.totalorder %s18, 1
      %p141 = scmp.ne.s32.totalorder %s136, %s138
      %p142 = scmp.eq.s32.totalorder %s18, 0
      %p143 = por %p141, %p142
      %p144 = scmp.ne.s32.totalorder %s136, %s138
      %p145 = scmp.eq.s32.totalorder %s23, 1
      %p146 = por %p144, %p145
      %p147 = scmp.ne.s32.totalorder %s138, %s139
      %p148 = scmp.eq.s32.totalorder %s23, 0
      %p149 = por %p147, %p148
      %p150 = scmp.ne.s32.totalorder %s138, %s139
      %p151 = scmp.eq.s32.totalorder %s24, 1
      %p152 = por %p150, %p151
      %p154 = scmp.ne.s32.totalorder %s139, %s153
      %p155 = scmp.eq.s32.totalorder %s24, 0
      %p156 = por %p154, %p155
      %s158 = sadd.s32 %s157, 1
      %p161 = scmp.eq.s32.totalorder %s18, 1
      %p162 = scmp.ne.s32.totalorder %s157, %s159
      %p163 = scmp.eq.s32.totalorder %s18, 0
      %p164 = por %p162, %p163
      %p165 = scmp.ne.s32.totalorder %s157, %s159
      %p166 = scmp.eq.s32.totalorder %s23, 1
      %p167 = por %p165, %p166
      %p168 = scmp.ne.s32.totalorder %s159, %s160
      %p169 = scmp.eq.s32.totalorder %s23, 0
      %p170 = por %p168, %p169
      %p171 = scmp.ne.s32.totalorder %s159, %s160
      %p172 = scmp.eq.s32.totalorder %s24, 1
      %p173 = por %p171, %p172
      %p175 = scmp.ne.s32.totalorder %s160, %s174
      %p176 = scmp.eq.s32.totalorder %s24, 0
      %p177 = por %p175, %p176
      %s178 = ssub.s32 %s18, %s25
      %p179 = scmp.eq.s32.totalorder %s178, 0
      %s181 = sadd.s32 %s180, 1
      %s182 = scalar_select %p179, %s180, %s181
      %p185 = pneg %p179
      %p186 = scmp.eq.s32.totalorder %s18, 1
      %p187 = por %p185, %p186
      %p188 = scmp.ne.s32.totalorder %s180, %s183
      %p189 = scmp.eq.s32.totalorder %s18, 0
      %p190 = por %p188, %p189
      %p191 = scmp.ne.s32.totalorder %s180, %s183
      %p192 = scmp.eq.s32.totalorder %s23, 1
      %p193 = por %p191, %p192
      %p194 = scmp.ne.s32.totalorder %s183, %s184
      %p195 = scmp.eq.s32.totalorder %s23, 0
      %p196 = por %p194, %p195
      %p197 = scmp.ne.s32.totalorder %s183, %s184
      %p198 = scmp.eq.s32.totalorder %s24, 1
      %p199 = por %p197, %p198
      %p201 = scmp.ne.s32.totalorder %s184, %s200
      %p202 = scmp.eq.s32.totalorder %s24, 0
      %p203 = por %p201, %p202
      %p204 = scmp.le.s32.totalorder 1, %s18
      %p205 = scmp.lt.s32.totalorder %s18, 3
      %p206 = pnand %p204, %p205
      %p207 = pneg %p206
      // Predicated region
      $region9: #{tpu_custom_call.1} parent=5 // pred_check
        _
      $region10: #{tpu_custom_call.1} parent=5 // pred_check_branch
        %209 = sbr.rel (%p206) target = $region12
      $region11: #{tpu_custom_call.1} parent=5 // pred_region
        %s210 = ssub.s32 %s18, 1
        // Predicated region
        $region13: #{tpu_custom_call.1} parent=11 // pred_check
          %p211 = pneg %p65
        $region14: #{tpu_custom_call.1} parent=11 // pred_check_branch
          %213 = sbr.rel (%p211) target = $region16
        $region15: #{tpu_custom_call.1} parent=11 // pred_region
          _
        $region16: #{tpu_custom_call.1} parent=11 // pred_fallthru
          _
        // Predicated region
        $region17: #{tpu_custom_call.1} parent=11 // pred_check
          %p214 = pneg %p86
        $region18: #{tpu_custom_call.1} parent=11 // pred_check_branch
          %216 = sbr.rel (%p214) target = $region20
        $region19: #{tpu_custom_call.1} parent=11 // pred_region
          _
        $region20: #{tpu_custom_call.1} parent=11 // pred_fallthru
          _
        // Predicated region
        $region21: #{tpu_custom_call.1} parent=11 // pred_check
          %p217 = pneg %p107
        $region22: #{tpu_custom_call.1} parent=11 // pred_check_branch
          %219 = sbr.rel (%p217) target = $region24
        $region23: #{tpu_custom_call.1} parent=11 // pred_region
          %s221 = ssub.s32 1024, 1024
          %222 = vsyncadd [#allocation3], %s221
          %s223 = sshll.u32 [#allocation2], 4
          %s224 = int_to_ptr.vmem [resolvable:$true] %s223
          %229 = dma.hbm_to_vmem [thread:$0]  %s3, 1024, %s224, [#allocation3], 64, 64, 4
        $region24: #{tpu_custom_call.1} parent=11 // pred_fallthru
          _
        // Predicated region
        $region25: #{tpu_custom_call.1} parent=11 // pred_check
          %p230 = pneg %p128
        $region26: #{tpu_custom_call.1} parent=11 // pred_check_branch
          %232 = sbr.rel (%p230) target = $region28
        $region27: #{tpu_custom_call.1} parent=11 // pred_region
          _
        $region28: #{tpu_custom_call.1} parent=11 // pred_fallthru
          _
        // Predicated region
        $region29: #{tpu_custom_call.1} parent=11 // pred_check
          %p233 = pneg %p149
        $region30: #{tpu_custom_call.1} parent=11 // pred_check_branch
          %235 = sbr.rel (%p233) target = $region32
        $region31: #{tpu_custom_call.1} parent=11 // pred_region
          %s237 = ssub.s32 1024, 1024
          %238 = vsyncadd [#allocation6], %s237
          %s239 = sshll.u32 [#allocation5], 4
          %s240 = int_to_ptr.vmem [resolvable:$true] %s239
          %245 = dma.hbm_to_vmem [thread:$0]  %s5, 1024, %s240, [#allocation6], 64, 64, 4
        $region32: #{tpu_custom_call.1} parent=11 // pred_fallthru
          _
        // Predicated region
        $region33: #{tpu_custom_call.1} parent=11 // pred_check
          %p246 = pneg %p170
        $region34: #{tpu_custom_call.1} parent=11 // pred_check_branch
          %248 = sbr.rel (%p246) target = $region36
        $region35: #{tpu_custom_call.1} parent=11 // pred_region
          _
        $region36: #{tpu_custom_call.1} parent=11 // pred_fallthru
          _
      $region12: #{tpu_custom_call.1} parent=5 // pred_fallthru
        _
      %p249 = scmp.lt.s32.totalorder %s18, 2
      // Predicated region
      $region37: #{tpu_custom_call.1} parent=5 // pred_check
        %p250 = pneg %p249
      $region38: #{tpu_custom_call.1} parent=5 // pred_check_branch
        %252 = sbr.rel (%p250) target = $region40
      $region39: #{tpu_custom_call.1} parent=5 // pred_region
        // Predicated region
        $region41: #{tpu_custom_call.1} parent=39 // pred_check
          %p253 = pneg %p38
        $region42: #{tpu_custom_call.1} parent=39 // pred_check_branch
          %255 = sbr.rel (%p253) target = $region44
        $region43: #{tpu_custom_call.1} parent=39 // pred_region
          %p256 = scmp.lt.s32.totalorder %s18, 1
          %s257 = scalar_select %p256, %s18, 1
          %s258 = smul.addr %s257, 4
          %s259 = scalar_lea.vmem %s0, %s258
        $region44: #{tpu_custom_call.1} parent=39 // pred_fallthru
          _
      $region40: #{tpu_custom_call.1} parent=5 // pred_fallthru
        _
      %p260 = scmp.le.s32.totalorder 1, %s18
      %p261 = scmp.lt.s32.totalorder %s18, 3
      %p262 = pnand %p260, %p261
      %p263 = pneg %p262
      // Predicated region
      $region45: #{tpu_custom_call.1} parent=5 // pred_check
        _
      $region46: #{tpu_custom_call.1} parent=5 // pred_check_branch
        %265 = sbr.rel (%p262) target = $region48
      $region47: #{tpu_custom_call.1} parent=5 // pred_region
        %s266 = ssub.s32 %s18, 1
        // Predicated region
        $region49: #{tpu_custom_call.1} parent=47 // pred_check
          %p267 = pneg %p107
        $region50: #{tpu_custom_call.1} parent=47 // pred_check_branch
          %269 = sbr.rel (%p267) target = $region52
        $region51: #{tpu_custom_call.1} parent=47 // pred_region
          %270 = dma.done [#allocation3], 1024
        $region52: #{tpu_custom_call.1} parent=47 // pred_fallthru
          _
        // Predicated region
        $region53: #{tpu_custom_call.1} parent=47 // pred_check
          %p271 = pneg %p149
        $region54: #{tpu_custom_call.1} parent=47 // pred_check_branch
          %273 = sbr.rel (%p271) target = $region56
        $region55: #{tpu_custom_call.1} parent=47 // pred_region
          %274 = dma.done [#allocation6], 1024
        $region56: #{tpu_custom_call.1} parent=47 // pred_fallthru
          _
        %p275 = scmp.lt.s32.totalorder %s23, 1
        %s276 = scalar_select %p275, %s23, 1
        %s277 = smul.addr %s276, 4
        %s278 = scalar_lea.vmem %s0, %s277
        %p279 = pneg %p44
        %p280 = pneg %p41
        %p281 = pneg %p65
        %p282 = pneg %p62
        %p283 = pneg %p86
        %p284 = pneg %p83
        %p285 = pneg %p107
        %p286 = pneg %p104
        %p287 = pneg %p128
        %p288 = pneg %p125
        %p289 = pneg %p149
        %p290 = pneg %p146
        %p291 = pneg %p170
        %p292 = pneg %p167
        %p293 = pneg %p196
        %p294 = pneg %p193
        %s295 = sand.u32 %s183, 1
        %s296 = scalar_lea.sflag [#allocation4], %s295
        %s297 = sand.u32 %s183, 1
        %s298 = smul.addr %s297, 8
        %s299 = scalar_lea.vmem [#allocation7], %s298
        %p300 = scmp.lt.s32.totalorder %s23, 1
        %s301 = scalar_select %p300, %s23, 1
        %s302 = smul.addr %s301, 4
        %s303 = scalar_lea.vmem %s0, %s302
        %v305 = vld [vmem:[%s303] sm:$0xf]
        %v306 = vld [vmem:[%s1] sm:$0x3]
        %v307 = vld [vmem:[%s2] sm:$0x1]
        %v309 = vlaneseq
        %v310 = vshrl.u32 %v309, 7
        %v311 = vsub.s32 0, %v310
        %v312 = vrot.slane %v307, %v311
        %vm314 = vcmask 31744
        %v316 = vsel %vm314, %v305, 0
        %vm318 = vcmask 1041408
        %v320 = vsel %vm318, %v306, 0
        %322 = vmatprep.subr.bf16.mxu0 0
        %323 = vmatpush1.bf16.msra.mxu0 %v320
        %324 = vmatprep.subr.bf16.mxu0 0
        %325 = vmatpush1.bf16.msra.mxu0 0
        %326 = vmatprep.subr.bf16.mxu0 0
        %327 = vmatpush1.bf16.msra.mxu0 0
        %328 = vmatprep.subr.bf16.mxu0 0
        %329 = vmatpush1.bf16.msra.mxu0 0
        %330 = vmatprep.subr.bf16.mxu0 0
        %331 = vmatpush1.bf16.msra.mxu0 0
        %332 = vmatprep.subr.bf16.mxu0 0
        %333 = vmatpush1.bf16.msra.mxu0 0
        %334 = vmatprep.subr.bf16.mxu0 0
        %335 = vmatpush1.bf16.msra.mxu0 0
        %336 = vmatprep.subr.bf16.mxu0 0
        %337 = vmatpush1.bf16.msra.mxu0 0
        %338 = vmatprep.subr.bf16.mxu0 0
        %339 = vmatpush1.bf16.msra.mxu0 0
        %340 = vmatprep.subr.bf16.mxu0 0
        %341 = vmatpush1.bf16.msra.mxu0 0
        %342 = vmatprep.subr.bf16.mxu0 0
        %343 = vmatpush1.bf16.msra.mxu0 0
        %344 = vmatprep.subr.bf16.mxu0 0
        %345 = vmatpush1.bf16.msra.mxu0 0
        %346 = vmatprep.subr.bf16.mxu0 0
        %347 = vmatpush1.bf16.msra.mxu0 0
        %348 = vmatprep.subr.bf16.mxu0 0
        %349 = vmatpush1.bf16.msra.mxu0 0
        %350 = vmatprep.subr.bf16.mxu0 0
        %351 = vmatpush1.bf16.msra.mxu0 0
        %352 = vmatprep.subr.bf16.mxu0 0
        %353 = vmatpush1.bf16.msra.mxu0 0
        %354 = vmatprep.mubr.bf16.mxu0 0
        %355 = vmatmul.mubr.bf16.gmra.mrb[0].mxu0 %v316
        %v356 = vpop.f32.mrb[0].mxu0
        %v357 = vadd.f32 %v312, %v356
        %v358 = vpop.f32.mrb[0].mxu0
        %v359 = vpop.f32.mrb[0].mxu0
        %v360 = vpop.f32.mrb[0].mxu0
        %361 = vdwg.mxu0
        %v362 = vmax.f32 %v357, 0.0
        %v363 = vld [vmem:[#allocation2] sm:$0xf]
        %v364 = vld [vmem:[#allocation2 + $0x4] sm:$0xf]
        %v365 = vld [vmem:[#allocation2 + $0x8] sm:$0xf]
        %v366 = vld [vmem:[#allocation2 + $0xc] sm:$0xf]
        %v367 = vld [vmem:[#allocation2 + $0x10] sm:$0xf]
        %v368 = vld [vmem:[#allocation2 + $0x14] sm:$0xf]
        %v369 = vld [vmem:[#allocation2 + $0x18] sm:$0xf]
        %v370 = vld [vmem:[#allocation2 + $0x1c] sm:$0xf]
        %v371 = vld [vmem:[#allocation2 + $0x20] sm:$0xf]
        %v372 = vld [vmem:[#allocation2 + $0x24] sm:$0xf]
        %v373 = vld [vmem:[#allocation2 + $0x28] sm:$0xf]
        %v374 = vld [vmem:[#allocation2 + $0x2c] sm:$0xf]
        %v375 = vld [vmem:[#allocation2 + $0x30] sm:$0xf]
        %v376 = vld [vmem:[#allocation2 + $0x34] sm:$0xf]
        %v377 = vld [vmem:[#allocation2 + $0x38] sm:$0xf]
        %v378 = vld [vmem:[#allocation2 + $0x3c] sm:$0xf]
        %v379 = vld [vmem:[%s4] sm:$0x1]
        %v380 = vpack.c.bf16 %v362, %v362
        %v382 = vlaneseq
        %v383 = vshrl.u32 %v382, 7
        %v384 = vsub.s32 0, %v383
        %v385 = vrot.slane %v379, %v384
        %v403 = vunpack.c.l.b16 %v363
        %v404 = vunpack.c.l.b16 %v364
        %v405 = vunpack.c.l.b16 %v365
        %v406 = vunpack.c.l.b16 %v366
        %v407 = vunpack.c.l.b16 %v367
        %v408 = vunpack.c.l.b16 %v368
        %v409 = vunpack.c.l.b16 %v369
        %v410 = vunpack.c.l.b16 %v370
        %v411 = vunpack.c.l.b16 %v371
        %v412 = vunpack.c.l.b16 %v372
        %v413 = vunpack.c.l.b16 %v373
        %v414 = vunpack.c.l.b16 %v374
        %v415 = vunpack.c.l.b16 %v375
        %v416 = vunpack.c.l.b16 %v376
        %v417 = vunpack.c.l.b16 %v377
        %v418 = vunpack.c.l.b16 %v378
        %v419 = vpack.c.b16 %v404, %v403
        %v420 = vpack.c.b16 %v406, %v405
        %v421 = vpack.c.b16 %v408, %v407
        %v422 = vpack.c.b16 %v410, %v409
        %v423 = vpack.c.b16 %v412, %v411
        %v424 = vpack.c.b16 %v414, %v413
        %v425 = vpack.c.b16 %v416, %v415
        %v426 = vpack.c.b16 %v418, %v417
        %435 = vmatprep.subr.bf16.mxu0 0
        %436 = vmatpush1.bf16.msra.mxu0 %v419
        %437 = vmatprep.subr.bf16.mxu0 0
        %438 = vmatpush1.bf16.msra.mxu0 %v420
        %439 = vmatprep.subr.bf16.mxu0 0
        %440 = vmatpush1.bf16.msra.mxu0 %v421
        %441 = vmatprep.subr.bf16.mxu0 0
        %442 = vmatpush1.bf16.msra.mxu0 %v422
        %443 = vmatprep.subr.bf16.mxu0 0
        %444 = vmatpush1.bf16.msra.mxu0 %v423
        %445 = vmatprep.subr.bf16.mxu0 0
        %446 = vmatpush1.bf16.msra.mxu0 %v424
        %447 = vmatprep.subr.bf16.mxu0 0
        %448 = vmatpush1.bf16.msra.mxu0 %v425
        %449 = vmatprep.subr.bf16.mxu0 0
        %450 = vmatpush1.bf16.msra.mxu0 %v426
        %451 = vmatprep.subr.bf16.mxu0 0
        %452 = vmatpush1.bf16.msra.mxu0 0
        %453 = vmatprep.subr.bf16.mxu0 0
        %454 = vmatpush1.bf16.msra.mxu0 0
        %455 = vmatprep.subr.bf16.mxu0 0
        %456 = vmatpush1.bf16.msra.mxu0 0
        %457 = vmatprep.subr.bf16.mxu0 0
        %458 = vmatpush1.bf16.msra.mxu0 0
        %459 = vmatprep.subr.bf16.mxu0 0
        %460 = vmatpush1.bf16.msra.mxu0 0
        %461 = vmatprep.subr.bf16.mxu0 0
        %462 = vmatpush1.bf16.msra.mxu0 0
        %463 = vmatprep.subr.bf16.mxu0 0
        %464 = vmatpush1.bf16.msra.mxu0 0
        %465 = vmatprep.subr.bf16.mxu0 0
        %466 = vmatpush1.bf16.msra.mxu0 0
        %467 = vmatprep.mubr.bf16.mxu0 0
        %468 = vmatmul.mubr.bf16.gmra.mrb[0].mxu0 %v380
        %v469 = vpop.f32.mrb[0].mxu0
        %v470 = vadd.f32 %v385, %v469
        %v471 = vpop.f32.mrb[0].mxu0
        %v472 = vpop.f32.mrb[0].mxu0
        %v473 = vpop.f32.mrb[0].mxu0
        %474 = vdwg.mxu0
        %v475 = vmax.f32 %v470, 0.0
        %v476 = vld [vmem:[#allocation5] sm:$0xf]
        %v477 = vld [vmem:[#allocation5 + $0x4] sm:$0xf]
        %v478 = vld [vmem:[#allocation5 + $0x8] sm:$0xf]
        %v479 = vld [vmem:[#allocation5 + $0xc] sm:$0xf]
        %v480 = vld [vmem:[#allocation5 + $0x10] sm:$0xf]
        %v481 = vld [vmem:[#allocation5 + $0x14] sm:$0xf]
        %v482 = vld [vmem:[#allocation5 + $0x18] sm:$0xf]
        %v483 = vld [vmem:[#allocation5 + $0x1c] sm:$0xf]
        %v484 = vld [vmem:[#allocation5 + $0x20] sm:$0xf]
        %v485 = vld [vmem:[#allocation5 + $0x24] sm:$0xf]
        %v486 = vld [vmem:[#allocation5 + $0x28] sm:$0xf]
        %v487 = vld [vmem:[#allocation5 + $0x2c] sm:$0xf]
        %v488 = vld [vmem:[#allocation5 + $0x30] sm:$0xf]
        %v489 = vld [vmem:[#allocation5 + $0x34] sm:$0xf]
        %v490 = vld [vmem:[#allocation5 + $0x38] sm:$0xf]
        %v491 = vld [vmem:[#allocation5 + $0x3c] sm:$0xf]
        %v492 = vld [vmem:[%s6] sm:$0x1]
        %v493 = vpack.c.bf16 %v475, %v475
        %v495 = vlaneseq
        %v496 = vshrl.u32 %v495, 7
        %v497 = vsub.s32 0, %v496
        %v498 = vrot.slane %v492, %v497
        %v516 = vunpack.c.l.b16 %v476
        %v517 = vunpack.c.l.b16 %v477
        %v518 = vunpack.c.l.b16 %v478
        %v519 = vunpack.c.l.b16 %v479
        %v520 = vunpack.c.l.b16 %v480
        %v521 = vunpack.c.l.b16 %v481
        %v522 = vunpack.c.l.b16 %v482
        %v523 = vunpack.c.l.b16 %v483
        %v524 = vunpack.c.l.b16 %v484
        %v525 = vunpack.c.l.b16 %v485
        %v526 = vunpack.c.l.b16 %v486
        %v527 = vunpack.c.l.b16 %v487
        %v528 = vunpack.c.l.b16 %v488
        %v529 = vunpack.c.l.b16 %v489
        %v530 = vunpack.c.l.b16 %v490
        %v531 = vunpack.c.l.b16 %v491
        %v532 = vpack.c.b16 %v517, %v516
        %v533 = vpack.c.b16 %v519, %v518
        %v534 = vpack.c.b16 %v521, %v520
        %v535 = vpack.c.b16 %v523, %v522
        %v536 = vpack.c.b16 %v525, %v524
        %v537 = vpack.c.b16 %v527, %v526
        %v538 = vpack.c.b16 %v529, %v528
        %v539 = vpack.c.b16 %v531, %v530
        %548 = vmatprep.subr.bf16.mxu0 0
        %549 = vmatpush1.bf16.msra.mxu0 %v532
        %550 = vmatprep.subr.bf16.mxu0 0
        %551 = vmatpush1.bf16.msra.mxu0 %v533
        %552 = vmatprep.subr.bf16.mxu0 0
        %553 = vmatpush1.bf16.msra.mxu0 %v534
        %554 = vmatprep.subr.bf16.mxu0 0
        %555 = vmatpush1.bf16.msra.mxu0 %v535
        %556 = vmatprep.subr.bf16.mxu0 0
        %557 = vmatpush1.bf16.msra.mxu0 %v536
        %558 = vmatprep.subr.bf16.mxu0 0
        %559 = vmatpush1.bf16.msra.mxu0 %v537
        %560 = vmatprep.subr.bf16.mxu0 0
        %561 = vmatpush1.bf16.msra.mxu0 %v538
        %562 = vmatprep.subr.bf16.mxu0 0
        %563 = vmatpush1.bf16.msra.mxu0 %v539
        %564 = vmatprep.subr.bf16.mxu0 0
        %565 = vmatpush1.bf16.msra.mxu0 0
        %566 = vmatprep.subr.bf16.mxu0 0
        %567 = vmatpush1.bf16.msra.mxu0 0
        %568 = vmatprep.subr.bf16.mxu0 0
        %569 = vmatpush1.bf16.msra.mxu0 0
        %570 = vmatprep.subr.bf16.mxu0 0
        %571 = vmatpush1.bf16.msra.mxu0 0
        %572 = vmatprep.subr.bf16.mxu0 0
        %573 = vmatpush1.bf16.msra.mxu0 0
        %574 = vmatprep.subr.bf16.mxu0 0
        %575 = vmatpush1.bf16.msra.mxu0 0
        %576 = vmatprep.subr.bf16.mxu0 0
        %577 = vmatpush1.bf16.msra.mxu0 0
        %578 = vmatprep.subr.bf16.mxu0 0
        %579 = vmatpush1.bf16.msra.mxu0 0
        %580 = vmatprep.mubr.bf16.mxu0 0
        %581 = vmatmul.mubr.bf16.gmra.mrb[0].mxu0 %v493
        %v582 = vpop.f32.mrb[0].mxu0
        %v583 = vadd.f32 %v498, %v582
        %v584 = vpop.f32.mrb[0].mxu0
        %v585 = vpop.f32.mrb[0].mxu0
        %v586 = vpop.f32.mrb[0].mxu0
        %587 = vdwg.mxu0
        %588 = vst [vmem:[%s299] sm:$0xff] %v583
        %s589 = sand.u32 %s183, 1
        %s590 = scalar_lea.sflag [#allocation4], %s589
        %s591 = sand.u32 %s183, 1
        %s592 = smul.addr %s591, 8
        %s593 = scalar_lea.vmem [#allocation7], %s592
        // Predicated region
        $region57: #{tpu_custom_call.1} parent=47 // pred_check
          %p594 = pneg %p193
        $region58: #{tpu_custom_call.1} parent=47 // pred_check_branch
          %596 = sbr.rel (%p594) target = $region60
        $region59: #{tpu_custom_call.1} parent=47 // pred_region
          %s598 = ssub.s32 128, 128
          %599 = vsyncadd %s590, %s598
          %s600 = smul.addr %s23, 128
          %s601 = scalar_lea.hbm %s7, %s600
          %s603 = sshll.u32 %s593, 4
          %s604 = int_to_ptr.vmem [resolvable:$true] %s603
          %606 = dma.vmem_to_hbm [thread:$0]  %s604, 128, %s601, %s590
        $region60: #{tpu_custom_call.1} parent=47 // pred_fallthru
          _
      $region48: #{tpu_custom_call.1} parent=5 // pred_fallthru
        _
      %p607 = scmp.le.s32.totalorder 2, %s18
      // Predicated region
      $region61: #{tpu_custom_call.1} parent=5 // pred_check
        %p608 = pneg %p607
      $region62: #{tpu_custom_call.1} parent=5 // pred_check_branch
        %610 = sbr.rel (%p608) target = $region64
      $region63: #{tpu_custom_call.1} parent=5 // pred_region
        %s611 = ssub.s32 %s18, 2
        // Predicated region
        $region65: #{tpu_custom_call.1} parent=63 // pred_check
          %p612 = pneg %p199
        $region66: #{tpu_custom_call.1} parent=63 // pred_check_branch
          %614 = sbr.rel (%p612) target = $region68
        $region67: #{tpu_custom_call.1} parent=63 // pred_region
          %s615 = sand.u32 %s184, 1
          %s616 = scalar_lea.sflag [#allocation4], %s615
          %s617 = sand.u32 %s184, 1
          %s618 = smul.addr %s617, 8
          %s619 = scalar_lea.vmem [#allocation7], %s618
          %620 = dma.done %s616, 128
        $region68: #{tpu_custom_call.1} parent=63 // pred_fallthru
          _
      $region64: #{tpu_custom_call.1} parent=5 // pred_fallthru
        _
    $region6: #{tpu_custom_call.1} parent=1 // loop_footer
      %s22 = sadd.s32 1, %s18
    $region7: #{tpu_custom_call.1} parent=1 // loop_footer_branch
      %17 = sbr.rel target = $region3
    $region8: #{tpu_custom_call.1} parent=1 // loop_exit
      _
    %621 = vsyncpa [#allocation3], 1
    %s622 = scalar_lea.sflag [#allocation3], 1
    %623 = vsyncpa %s622, 1
    %624 = vsyncpa [#allocation6], 1
    %625 = vsyncpa [#allocation4], 1
    %s626 = scalar_lea.sflag [#allocation4], 1
    %627 = vsyncpa %s626, 1

</llo_original>
